<compile_context>
chip_gen: v7x
topology: tpu7x:2x2x1
jax: 0.10.0
libtpu: 0.0.40
codegen_flags: <defaults>
</compile_context>

<pallas_src>
import jax
import jax.numpy as jnp
from jax.experimental import pallas as pl
from jax.experimental.pallas import tpu as pltpu

_INNER_MLP_MULT = 2
_BN_EPS = 1e-5
_LANES = 128


def _round_up(x, m):
    return (x + m - 1) // m * m


def _mm(x, w):
    """MXU matmul: bf16 operands, f32 accumulation."""
    return jnp.dot(x.astype(jnp.bfloat16), w.astype(jnp.bfloat16),
                   preferred_element_type=jnp.float32)


def _bn_relu(h, gamma, beta):
    """BatchNorm1d (training-mode batch stats, biased variance) -> ReLU.

    One-pass statistics: var = E[x^2] - mean^2, so only two cross-sublane (XLU)
    reductions and no centered (R, C) temporary. All math stays f32.
    """
    inv_r = 1.0 / h.shape[0]
    s1 = jnp.sum(h, axis=0, keepdims=True)
    s2 = jnp.sum(h * h, axis=0, keepdims=True)
    mean = s1 * inv_r
    var = jnp.maximum(s2 * inv_r - mean * mean, 0.0)
    hn = (h - mean) * jax.lax.rsqrt(var + _BN_EPS)
    return jnp.maximum(hn * gamma + beta, 0.0)


def conv_layer_kernel(idx_self_col_ref, idx_partner_col_ref, idx_self_row_ref,
                      edge_rep_ref, node_rep_ref,
                      we1e_ref, we1si_ref, we1s_ref, ge1_ref, be1_ref,
                      we2_ref, ge2_ref, be2_ref,
                      wn1n_ref, wn1e_ref, gn1_ref, bn1_ref,
                      wn2_ref, gn2_ref, bn2_ref,
                      node_out_ref, edge_out_ref):
    R = edge_out_ref.shape[0]          # 2E edge-slot rows
    N = node_out_ref.shape[0]          # nodes

    node_tbl = node_rep_ref[...].astype(jnp.bfloat16)        # (N, Hp)

    # ---- node2edge: one-hot row gathers built on the fly from iota compares ---
    # Fully vectorized (VPU compare + MXU matmul); no serial loop, no HBM
    # one-hot, and no unchecked dynamic VMEM offsets (OOB index -> zero row).
    slot_vs_node = jax.lax.broadcasted_iota(jnp.int32, (R, N), 1)
    oh_self = jnp.where(slot_vs_node == idx_self_col_ref[...],
                        1.0, 0.0).astype(jnp.bfloat16)        # (R, N)
    oh_partner = jnp.where(slot_vs_node == idx_partner_col_ref[...],
                           1.0, 0.0).astype(jnp.bfloat16)     # (R, N)
    ga = jnp.dot(oh_self, node_tbl, preferred_element_type=jnp.float32)     # identity rows
    gb = jnp.dot(oh_partner, node_tbl, preferred_element_type=jnp.float32)  # partner rows

    # ---- edge_mlp layer 1: split matmuls, identity weight folded into sum weight
    #   cat([edge_rep, ga+gb, ga], -1) @ We1
    #     == edge_rep @ We1_e + ga @ (We1_s + We1_i) + gb @ We1_s
    h = (_mm(edge_rep_ref[...], we1e_ref[...])
         + _mm(ga, we1si_ref[...])
         + _mm(gb, we1s_ref[...]))
    y = _bn_relu(h, ge1_ref[...], be1_ref[...])
    # ---- edge_mlp layer 2 ------------------------------------------------------
    edge_out = _bn_relu(_mm(y, we2_ref[...]), ge2_ref[...], be2_ref[...])
    edge_out_ref[...] = edge_out

    # ---- edge2node: segment scatter-add as an MXU matmul against an on-the-fly
    #      transposed one-hot (N, R); replaces the serial read-modify-write loop.
    node_vs_slot = jax.lax.broadcasted_iota(jnp.int32, (N, R), 0)
    oh_scatter = jnp.where(node_vs_slot == idx_self_row_ref[...],
                           1.0, 0.0).astype(jnp.bfloat16)     # (N, R)
    edge2node = jnp.dot(oh_scatter, edge_out.astype(jnp.bfloat16),
                        preferred_element_type=jnp.float32)   # (N, Hp)

    # ---- node_mlp (edge2node consumed straight from VMEM, no HBM round trip) ---
    h = _mm(node_rep_ref[...], wn1n_ref[...]) + _mm(edge2node, wn1e_ref[...])
    y = _bn_relu(h, gn1_ref[...], bn1_ref[...])
    node_out_ref[...] = _bn_relu(_mm(y, wn2_ref[...]), gn2_ref[...], bn2_ref[...])


def conv_layer_forward(node_rep, edge_rep, edge_index, params):
    """ConvLayer.forward.  node_rep: (N, H) f32, edge_rep: (2E, H) f32,
    edge_index: (E, 2) int32.  Returns (node_out (N, H), edge_out (2E, H))."""
    N, H = node_rep.shape
    E = edge_index.shape[0]
    R = 2 * E                                  # one row per (edge, endpoint)
    M = _INNER_MLP_MULT * H

    # Lane-dense feature dims: padded columns are exactly zero through
    # Linear -> BN -> ReLU and are sliced off after the kernel, so all matmuls
    # and output stores stay unmasked.
    Hp = _round_up(H, _LANES)
    Mp = _round_up(M, _LANES)

    # Per-slot node indices: slot 2e -> edge_index[e,0], 2e+1 -> edge_index[e,1];
    # the partner index is the adjacent-pair swap.
    idx_self = edge_index.reshape(R).astype(jnp.int32)
    idx_partner = jnp.flip(edge_index, axis=1).reshape(R).astype(jnp.int32)
    idx_self_col = idx_self.reshape(R, 1)      # drives the (R, N) gather one-hots
    idx_partner_col = idx_partner.reshape(R, 1)
    idx_self_row = idx_self.reshape(1, R)      # drives the (N, R) scatter one-hot

    (we1, ge1, be1, we2, ge2, be2,
     wn1, gn1, bn1, wn2, gn2, bn2) = params

    # Trace-time weight slices + fold of the linmaps identity channel.
    we1_e, we1_s, we1_i = we1[:H], we1[H:2 * H], we1[2 * H:]
    we1_si = we1_s + we1_i
    wn1_n, wn1_e = wn1[:H], wn1[H:]

    def pad2(x, rows, cols, dtype=None):
        x = jnp.pad(x, ((0, rows - x.shape[0]), (0, cols - x.shape[1])))
        return x if dtype is None else x.astype(dtype)

    bf = jnp.bfloat16
    args = (
        idx_self_col, idx_partner_col, idx_self_row,
        pad2(edge_rep, R, Hp), pad2(node_rep, N, Hp),
        pad2(we1_e, Hp, Mp, bf), pad2(we1_si, Hp, Mp, bf), pad2(we1_s, Hp, Mp, bf),
        pad2(ge1, 1, Mp), pad2(be1, 1, Mp),
        pad2(we2, Mp, Hp, bf), pad2(ge2, 1, Hp), pad2(be2, 1, Hp),
        pad2(wn1_n, Hp, Mp, bf), pad2(wn1_e, Hp, Mp, bf),
        pad2(gn1, 1, Mp), pad2(bn1, 1, Mp),
        pad2(wn2, Mp, Hp, bf), pad2(gn2, 1, Hp), pad2(bn2, 1, Hp),
    )

    vmem = pl.BlockSpec(memory_space=pltpu.MemorySpace.VMEM)
    node_out, edge_out = pl.pallas_call(
        conv_layer_kernel,
        out_shape=(jax.ShapeDtypeStruct((N, Hp), jnp.float32),
                   jax.ShapeDtypeStruct((R, Hp), jnp.float32)),
        in_specs=[vmem] * len(args),
        out_specs=(vmem, vmem),
        # v7x has 64 MiB VMEM per TensorCore: keep the ceiling <= ~48 MiB so the
        # same config fits every generation; raise toward ~100 MiB on v5e/v6e to
        # keep larger graphs fully resident.
        compiler_params=pltpu.CompilerParams(vmem_limit_bytes=48 * 1024 * 1024),
    )(*args)

    return node_out[:, :H], edge_out[:, :H]


def init_params(key, hidden_dim):
    """Deterministic synthetic init. Linear weights stored (in, out); BN gamma=1, beta=0."""
    Hm = hidden_dim * _INNER_MLP_MULT
    k = jax.random.split(key, 4)
    scale = 0.1
    # edge_mlp: Linear(3H -> 2H), BN(2H), ReLU, Linear(2H -> H), BN(H), ReLU
    we1 = scale * jax.random.normal(k[0], (3 * hidden_dim, Hm), jnp.float32)
    we2 = scale * jax.random.normal(k[1], (Hm, hidden_dim), jnp.float32)
    # node_mlp: Linear(2H -> 2H), BN(2H), ReLU, Linear(2H -> H), BN(H), ReLU
    wn1 = scale * jax.random.normal(k[2], (2 * hidden_dim, Hm), jnp.float32)
    wn2 = scale * jax.random.normal(k[3], (Hm, hidden_dim), jnp.float32)
    ones_m = jnp.ones((1, Hm), jnp.float32)
    zeros_m = jnp.zeros((1, Hm), jnp.float32)
    ones_h = jnp.ones((1, hidden_dim), jnp.float32)
    zeros_h = jnp.zeros((1, hidden_dim), jnp.float32)
    return (we1, ones_m, zeros_m, we2, ones_h, zeros_h,
            wn1, ones_m, zeros_m, wn2, ones_h, zeros_h)


if __name__ == "__main__":
    key = jax.random.PRNGKey(0)
    hidden_dim = 32
    num_nodes = 16
    num_edges = 24

    k_node, k_edge, k_idx, k_par = jax.random.split(key, 4)
    node_rep = jax.random.normal(k_node, (num_nodes, hidden_dim), jnp.float32)
    edge_rep = jax.random.normal(k_edge, (2 * num_edges, hidden_dim), jnp.float32)

    src = jax.random.randint(k_idx, (num_edges,), 0, num_nodes, jnp.int32)
    dst = (src + 1 + jax.random.randint(jax.random.fold_in(k_idx, 1),
                                        (num_edges,), 0, num_nodes - 1,
                                        jnp.int32)) % num_nodes
    edge_index = jnp.stack([src, dst], axis=-1)  # (E, 2)

    params = init_params(k_par, hidden_dim)

    node_out, edge_out = conv_layer_forward(node_rep, edge_rep, edge_index, params)
    jax.block_until_ready((node_out, edge_out))

    assert node_out.shape == (num_nodes, hidden_dim)
    assert edge_out.shape == (2 * num_edges, hidden_dim)
    assert bool(jnp.all(jnp.isfinite(node_out)))
    assert bool(jnp.all(jnp.isfinite(edge_out)))
    print("KERNEL_OK")
</pallas_src>

<mosaic_0001>
module attributes {stable_mosaic.version = 11 : i64} {
  func.func @conv_layer_kernel(%arg0: memref<48x1xi32, #tpu.memory_space<vmem>>, %arg1: memref<48x1xi32, #tpu.memory_space<vmem>>, %arg2: memref<1x48xi32, #tpu.memory_space<vmem>>, %arg3: memref<48x128xf32, #tpu.memory_space<vmem>>, %arg4: memref<16x128xf32, #tpu.memory_space<vmem>>, %arg5: memref<128x128xbf16, #tpu.memory_space<vmem>>, %arg6: memref<128x128xbf16, #tpu.memory_space<vmem>>, %arg7: memref<128x128xbf16, #tpu.memory_space<vmem>>, %arg8: memref<1x128xf32, #tpu.memory_space<vmem>>, %arg9: memref<1x128xf32, #tpu.memory_space<vmem>>, %arg10: memref<128x128xbf16, #tpu.memory_space<vmem>>, %arg11: memref<1x128xf32, #tpu.memory_space<vmem>>, %arg12: memref<1x128xf32, #tpu.memory_space<vmem>>, %arg13: memref<128x128xbf16, #tpu.memory_space<vmem>>, %arg14: memref<128x128xbf16, #tpu.memory_space<vmem>>, %arg15: memref<1x128xf32, #tpu.memory_space<vmem>>, %arg16: memref<1x128xf32, #tpu.memory_space<vmem>>, %arg17: memref<128x128xbf16, #tpu.memory_space<vmem>>, %arg18: memref<1x128xf32, #tpu.memory_space<vmem>>, %arg19: memref<1x128xf32, #tpu.memory_space<vmem>>, %arg20: memref<16x128xf32, #tpu.memory_space<vmem>>, %arg21: memref<48x128xf32, #tpu.memory_space<vmem>>) attributes {dimension_semantics = [], scalar_prefetch = 0 : i64, scratch_operands = 0 : i64, tpu.core_type = #tpu.core_type<tc>} {
    %c0 = arith.constant 0 : index
    %c0_0 = arith.constant 0 : index
    %0 = vector.load %arg4[%c0, %c0_0] : memref<16x128xf32, #tpu.memory_space<vmem>>, vector<16x128xf32>
    %1 = arith.truncf %0 : vector<16x128xf32> to vector<16x128xbf16>
    %2 = tpu.iota {dimensions = array<i32: 1>} : vector<48x16xi32>
    %c0_1 = arith.constant 0 : index
    %c0_2 = arith.constant 0 : index
    %3 = vector.load %arg0[%c0_1, %c0_2] : memref<48x1xi32, #tpu.memory_space<vmem>>, vector<48x1xi32>
    %4 = vector.broadcast %3 : vector<48x1xi32> to vector<48x16xi32>
    %5 = arith.cmpi eq, %2, %4 : vector<48x16xi32>
    %cst = arith.constant 1.000000e+00 : f32
    %cst_3 = arith.constant 0.000000e+00 : f32
    %6 = vector.broadcast %cst : f32 to vector<48x16xf32>
    %7 = vector.broadcast %cst_3 : f32 to vector<48x16xf32>
    %8 = arith.select %5, %6, %7 : vector<48x16xi1>, vector<48x16xf32>
    %9 = arith.truncf %8 : vector<48x16xf32> to vector<48x16xbf16>
    %c0_4 = arith.constant 0 : index
    %c0_5 = arith.constant 0 : index
    %10 = vector.load %arg1[%c0_4, %c0_5] : memref<48x1xi32, #tpu.memory_space<vmem>>, vector<48x1xi32>
    %11 = vector.broadcast %10 : vector<48x1xi32> to vector<48x16xi32>
    %12 = arith.cmpi eq, %2, %11 : vector<48x16xi32>
    %cst_6 = arith.constant 1.000000e+00 : f32
    %cst_7 = arith.constant 0.000000e+00 : f32
    %13 = vector.broadcast %cst_6 : f32 to vector<48x16xf32>
    %14 = vector.broadcast %cst_7 : f32 to vector<48x16xf32>
    %15 = arith.select %12, %13, %14 : vector<48x16xi1>, vector<48x16xf32>
    %16 = arith.truncf %15 : vector<48x16xf32> to vector<48x16xbf16>
    %cst_8 = arith.constant dense<0.000000e+00> : vector<48x128xf32>
    %17 = tpu.matmul %9, %1, %cst_8 {dimension_numbers = #tpu.dot_dimension_numbers<[1], [0], [0], [1], [0, 0, 1, 1], [], []>} : vector<48x16xbf16>, vector<16x128xbf16>, vector<48x128xf32> -> vector<48x128xf32>
    %cst_9 = arith.constant dense<0.000000e+00> : vector<48x128xf32>
    %18 = tpu.matmul %16, %1, %cst_9 {dimension_numbers = #tpu.dot_dimension_numbers<[1], [0], [0], [1], [0, 0, 1, 1], [], []>} : vector<48x16xbf16>, vector<16x128xbf16>, vector<48x128xf32> -> vector<48x128xf32>
    %c0_10 = arith.constant 0 : index
    %c0_11 = arith.constant 0 : index
    %19 = vector.load %arg3[%c0_10, %c0_11] : memref<48x128xf32, #tpu.memory_space<vmem>>, vector<48x128xf32>
    %c0_12 = arith.constant 0 : index
    %c0_13 = arith.constant 0 : index
    %20 = vector.load %arg5[%c0_12, %c0_13] : memref<128x128xbf16, #tpu.memory_space<vmem>>, vector<128x128xbf16>
    %21 = arith.truncf %19 : vector<48x128xf32> to vector<48x128xbf16>
    %cst_14 = arith.constant dense<0.000000e+00> : vector<48x128xf32>
    %22 = tpu.matmul %21, %20, %cst_14 {dimension_numbers = #tpu.dot_dimension_numbers<[1], [0], [0], [1], [0, 0, 1, 1], [], []>} : vector<48x128xbf16>, vector<128x128xbf16>, vector<48x128xf32> -> vector<48x128xf32>
    %c0_15 = arith.constant 0 : index
    %c0_16 = arith.constant 0 : index
    %23 = vector.load %arg6[%c0_15, %c0_16] : memref<128x128xbf16, #tpu.memory_space<vmem>>, vector<128x128xbf16>
    %24 = arith.truncf %17 : vector<48x128xf32> to vector<48x128xbf16>
    %cst_17 = arith.constant dense<0.000000e+00> : vector<48x128xf32>
    %25 = tpu.matmul %24, %23, %cst_17 {dimension_numbers = #tpu.dot_dimension_numbers<[1], [0], [0], [1], [0, 0, 1, 1], [], []>} : vector<48x128xbf16>, vector<128x128xbf16>, vector<48x128xf32> -> vector<48x128xf32>
    %26 = arith.addf %22, %25 : vector<48x128xf32>
    %c0_18 = arith.constant 0 : index
    %c0_19 = arith.constant 0 : index
    %27 = vector.load %arg7[%c0_18, %c0_19] : memref<128x128xbf16, #tpu.memory_space<vmem>>, vector<128x128xbf16>
    %28 = arith.truncf %18 : vector<48x128xf32> to vector<48x128xbf16>
    %cst_20 = arith.constant dense<0.000000e+00> : vector<48x128xf32>
    %29 = tpu.matmul %28, %27, %cst_20 {dimension_numbers = #tpu.dot_dimension_numbers<[1], [0], [0], [1], [0, 0, 1, 1], [], []>} : vector<48x128xbf16>, vector<128x128xbf16>, vector<48x128xf32> -> vector<48x128xf32>
    %30 = arith.addf %26, %29 : vector<48x128xf32>
    %c0_21 = arith.constant 0 : index
    %c0_22 = arith.constant 0 : index
    %31 = vector.load %arg8[%c0_21, %c0_22] : memref<1x128xf32, #tpu.memory_space<vmem>>, vector<1x128xf32>
    %c0_23 = arith.constant 0 : index
    %c0_24 = arith.constant 0 : index
    %32 = vector.load %arg9[%c0_23, %c0_24] : memref<1x128xf32, #tpu.memory_space<vmem>>, vector<1x128xf32>
    %cst_25 = arith.constant dense<0.000000e+00> : vector<128xf32>
    %33 = vector.multi_reduction <add>, %30, %cst_25 [0] : vector<48x128xf32> to vector<128xf32>
    %34 = vector.shape_cast %33 : vector<128xf32> to vector<1x128xf32>
    %35 = arith.mulf %30, %30 : vector<48x128xf32>
    %cst_26 = arith.constant dense<0.000000e+00> : vector<128xf32>
    %36 = vector.multi_reduction <add>, %35, %cst_26 [0] : vector<48x128xf32> to vector<128xf32>
    %37 = vector.shape_cast %36 : vector<128xf32> to vector<1x128xf32>
    %cst_27 = arith.constant 0.020833334 : f32
    %38 = vector.broadcast %cst_27 : f32 to vector<1x128xf32>
    %39 = arith.mulf %34, %38 : vector<1x128xf32>
    %cst_28 = arith.constant 0.020833334 : f32
    %40 = vector.broadcast %cst_28 : f32 to vector<1x128xf32>
    %41 = arith.mulf %37, %40 : vector<1x128xf32>
    %42 = arith.mulf %39, %39 : vector<1x128xf32>
    %43 = arith.subf %41, %42 : vector<1x128xf32>
    %cst_29 = arith.constant 0.000000e+00 : f32
    %44 = vector.broadcast %cst_29 : f32 to vector<1x128xf32>
    %45 = arith.maximumf %43, %44 : vector<1x128xf32>
    %46 = vector.broadcast %39 : vector<1x128xf32> to vector<48x128xf32>
    %47 = arith.subf %30, %46 : vector<48x128xf32>
    %cst_30 = arith.constant 9.99999974E-6 : f32
    %48 = vector.broadcast %cst_30 : f32 to vector<1x128xf32>
    %49 = arith.addf %45, %48 : vector<1x128xf32>
    %50 = math.rsqrt %49 : vector<1x128xf32>
    %51 = vector.broadcast %50 : vector<1x128xf32> to vector<48x128xf32>
    %52 = arith.mulf %47, %51 : vector<48x128xf32>
    %53 = vector.broadcast %31 : vector<1x128xf32> to vector<48x128xf32>
    %54 = arith.mulf %52, %53 : vector<48x128xf32>
    %55 = vector.broadcast %32 : vector<1x128xf32> to vector<48x128xf32>
    %56 = arith.addf %54, %55 : vector<48x128xf32>
    %cst_31 = arith.constant 0.000000e+00 : f32
    %57 = vector.broadcast %cst_31 : f32 to vector<48x128xf32>
    %58 = arith.maximumf %56, %57 : vector<48x128xf32>
    %c0_32 = arith.constant 0 : index
    %c0_33 = arith.constant 0 : index
    %59 = vector.load %arg10[%c0_32, %c0_33] : memref<128x128xbf16, #tpu.memory_space<vmem>>, vector<128x128xbf16>
    %60 = arith.truncf %58 : vector<48x128xf32> to vector<48x128xbf16>
    %cst_34 = arith.constant dense<0.000000e+00> : vector<48x128xf32>
    %61 = tpu.matmul %60, %59, %cst_34 {dimension_numbers = #tpu.dot_dimension_numbers<[1], [0], [0], [1], [0, 0, 1, 1], [], []>} : vector<48x128xbf16>, vector<128x128xbf16>, vector<48x128xf32> -> vector<48x128xf32>
    %c0_35 = arith.constant 0 : index
    %c0_36 = arith.constant 0 : index
    %62 = vector.load %arg11[%c0_35, %c0_36] : memref<1x128xf32, #tpu.memory_space<vmem>>, vector<1x128xf32>
    %c0_37 = arith.constant 0 : index
    %c0_38 = arith.constant 0 : index
    %63 = vector.load %arg12[%c0_37, %c0_38] : memref<1x128xf32, #tpu.memory_space<vmem>>, vector<1x128xf32>
    %cst_39 = arith.constant dense<0.000000e+00> : vector<128xf32>
    %64 = vector.multi_reduction <add>, %61, %cst_39 [0] : vector<48x128xf32> to vector<128xf32>
    %65 = vector.shape_cast %64 : vector<128xf32> to vector<1x128xf32>
    %66 = arith.mulf %61, %61 : vector<48x128xf32>
    %cst_40 = arith.constant dense<0.000000e+00> : vector<128xf32>
    %67 = vector.multi_reduction <add>, %66, %cst_40 [0] : vector<48x128xf32> to vector<128xf32>
    %68 = vector.shape_cast %67 : vector<128xf32> to vector<1x128xf32>
    %cst_41 = arith.constant 0.020833334 : f32
    %69 = vector.broadcast %cst_41 : f32 to vector<1x128xf32>
    %70 = arith.mulf %65, %69 : vector<1x128xf32>
    %cst_42 = arith.constant 0.020833334 : f32
    %71 = vector.broadcast %cst_42 : f32 to vector<1x128xf32>
    %72 = arith.mulf %68, %71 : vector<1x128xf32>
    %73 = arith.mulf %70, %70 : vector<1x128xf32>
    %74 = arith.subf %72, %73 : vector<1x128xf32>
    %cst_43 = arith.constant 0.000000e+00 : f32
    %75 = vector.broadcast %cst_43 : f32 to vector<1x128xf32>
    %76 = arith.maximumf %74, %75 : vector<1x128xf32>
    %77 = vector.broadcast %70 : vector<1x128xf32> to vector<48x128xf32>
    %78 = arith.subf %61, %77 : vector<48x128xf32>
    %cst_44 = arith.constant 9.99999974E-6 : f32
    %79 = vector.broadcast %cst_44 : f32 to vector<1x128xf32>
    %80 = arith.addf %76, %79 : vector<1x128xf32>
    %81 = math.rsqrt %80 : vector<1x128xf32>
    %82 = vector.broadcast %81 : vector<1x128xf32> to vector<48x128xf32>
    %83 = arith.mulf %78, %82 : vector<48x128xf32>
    %84 = vector.broadcast %62 : vector<1x128xf32> to vector<48x128xf32>
    %85 = arith.mulf %83, %84 : vector<48x128xf32>
    %86 = vector.broadcast %63 : vector<1x128xf32> to vector<48x128xf32>
    %87 = arith.addf %85, %86 : vector<48x128xf32>
    %cst_45 = arith.constant 0.000000e+00 : f32
    %88 = vector.broadcast %cst_45 : f32 to vector<48x128xf32>
    %89 = arith.maximumf %87, %88 : vector<48x128xf32>
    %c0_46 = arith.constant 0 : index
    %c0_47 = arith.constant 0 : index
    %90 = vector.load %arg21[%c0_46, %c0_47] : memref<48x128xf32, #tpu.memory_space<vmem>>, vector<48x128xf32>
    tpu.vector_store %arg21[%c0_46, %c0_47], %89 {strides = array<i32>} : memref<48x128xf32, #tpu.memory_space<vmem>>, vector<48x128xf32>,
    %91 = tpu.iota {dimensions = array<i32: 0>} : vector<16x48xi32>
    %c0_48 = arith.constant 0 : index
    %c0_49 = arith.constant 0 : index
    %92 = vector.load %arg2[%c0_48, %c0_49] : memref<1x48xi32, #tpu.memory_space<vmem>>, vector<1x48xi32>
    %93 = vector.broadcast %92 : vector<1x48xi32> to vector<16x48xi32>
    %94 = arith.cmpi eq, %91, %93 : vector<16x48xi32>
    %cst_50 = arith.constant 1.000000e+00 : f32
    %cst_51 = arith.constant 0.000000e+00 : f32
    %95 = vector.broadcast %cst_50 : f32 to vector<16x48xf32>
    %96 = vector.broadcast %cst_51 : f32 to vector<16x48xf32>
    %97 = arith.select %94, %95, %96 : vector<16x48xi1>, vector<16x48xf32>
    %98 = arith.truncf %97 : vector<16x48xf32> to vector<16x48xbf16>
    %99 = arith.truncf %89 : vector<48x128xf32> to vector<48x128xbf16>
    %cst_52 = arith.constant dense<0.000000e+00> : vector<16x128xf32>
    %100 = tpu.matmul %98, %99, %cst_52 {dimension_numbers = #tpu.dot_dimension_numbers<[1], [0], [0], [1], [0, 0, 1, 1], [], []>} : vector<16x48xbf16>, vector<48x128xbf16>, vector<16x128xf32> -> vector<16x128xf32>
    %c0_53 = arith.constant 0 : index
    %c0_54 = arith.constant 0 : index
    %101 = vector.load %arg4[%c0_53, %c0_54] : memref<16x128xf32, #tpu.memory_space<vmem>>, vector<16x128xf32>
    %c0_55 = arith.constant 0 : index
    %c0_56 = arith.constant 0 : index
    %102 = vector.load %arg13[%c0_55, %c0_56] : memref<128x128xbf16, #tpu.memory_space<vmem>>, vector<128x128xbf16>
    %103 = arith.truncf %101 : vector<16x128xf32> to vector<16x128xbf16>
    %cst_57 = arith.constant dense<0.000000e+00> : vector<16x128xf32>
    %104 = tpu.matmul %103, %102, %cst_57 {dimension_numbers = #tpu.dot_dimension_numbers<[1], [0], [0], [1], [0, 0, 1, 1], [], []>} : vector<16x128xbf16>, vector<128x128xbf16>, vector<16x128xf32> -> vector<16x128xf32>
    %c0_58 = arith.constant 0 : index
    %c0_59 = arith.constant 0 : index
    %105 = vector.load %arg14[%c0_58, %c0_59] : memref<128x128xbf16, #tpu.memory_space<vmem>>, vector<128x128xbf16>
    %106 = arith.truncf %100 : vector<16x128xf32> to vector<16x128xbf16>
    %cst_60 = arith.constant dense<0.000000e+00> : vector<16x128xf32>
    %107 = tpu.matmul %106, %105, %cst_60 {dimension_numbers = #tpu.dot_dimension_numbers<[1], [0], [0], [1], [0, 0, 1, 1], [], []>} : vector<16x128xbf16>, vector<128x128xbf16>, vector<16x128xf32> -> vector<16x128xf32>
    %108 = arith.addf %104, %107 : vector<16x128xf32>
    %c0_61 = arith.constant 0 : index
    %c0_62 = arith.constant 0 : index
    %109 = vector.load %arg15[%c0_61, %c0_62] : memref<1x128xf32, #tpu.memory_space<vmem>>, vector<1x128xf32>
    %c0_63 = arith.constant 0 : index
    %c0_64 = arith.constant 0 : index
    %110 = vector.load %arg16[%c0_63, %c0_64] : memref<1x128xf32, #tpu.memory_space<vmem>>, vector<1x128xf32>
    %cst_65 = arith.constant dense<0.000000e+00> : vector<128xf32>
    %111 = vector.multi_reduction <add>, %108, %cst_65 [0] : vector<16x128xf32> to vector<128xf32>
    %112 = vector.shape_cast %111 : vector<128xf32> to vector<1x128xf32>
    %113 = arith.mulf %108, %108 : vector<16x128xf32>
    %cst_66 = arith.constant dense<0.000000e+00> : vector<128xf32>
    %114 = vector.multi_reduction <add>, %113, %cst_66 [0] : vector<16x128xf32> to vector<128xf32>
    %115 = vector.shape_cast %114 : vector<128xf32> to vector<1x128xf32>
    %cst_67 = arith.constant 6.250000e-02 : f32
    %116 = vector.broadcast %cst_67 : f32 to vector<1x128xf32>
    %117 = arith.mulf %112, %116 : vector<1x128xf32>
    %cst_68 = arith.constant 6.250000e-02 : f32
    %118 = vector.broadcast %cst_68 : f32 to vector<1x128xf32>
    %119 = arith.mulf %115, %118 : vector<1x128xf32>
    %120 = arith.mulf %117, %117 : vector<1x128xf32>
    %121 = arith.subf %119, %120 : vector<1x128xf32>
    %cst_69 = arith.constant 0.000000e+00 : f32
    %122 = vector.broadcast %cst_69 : f32 to vector<1x128xf32>
    %123 = arith.maximumf %121, %122 : vector<1x128xf32>
    %124 = vector.broadcast %117 : vector<1x128xf32> to vector<16x128xf32>
    %125 = arith.subf %108, %124 : vector<16x128xf32>
    %cst_70 = arith.constant 9.99999974E-6 : f32
    %126 = vector.broadcast %cst_70 : f32 to vector<1x128xf32>
    %127 = arith.addf %123, %126 : vector<1x128xf32>
    %128 = math.rsqrt %127 : vector<1x128xf32>
    %129 = vector.broadcast %128 : vector<1x128xf32> to vector<16x128xf32>
    %130 = arith.mulf %125, %129 : vector<16x128xf32>
    %131 = vector.broadcast %109 : vector<1x128xf32> to vector<16x128xf32>
    %132 = arith.mulf %130, %131 : vector<16x128xf32>
    %133 = vector.broadcast %110 : vector<1x128xf32> to vector<16x128xf32>
    %134 = arith.addf %132, %133 : vector<16x128xf32>
    %cst_71 = arith.constant 0.000000e+00 : f32
    %135 = vector.broadcast %cst_71 : f32 to vector<16x128xf32>
    %136 = arith.maximumf %134, %135 : vector<16x128xf32>
    %c0_72 = arith.constant 0 : index
    %c0_73 = arith.constant 0 : index
    %137 = vector.load %arg17[%c0_72, %c0_73] : memref<128x128xbf16, #tpu.memory_space<vmem>>, vector<128x128xbf16>
    %138 = arith.truncf %136 : vector<16x128xf32> to vector<16x128xbf16>
    %cst_74 = arith.constant dense<0.000000e+00> : vector<16x128xf32>
    %139 = tpu.matmul %138, %137, %cst_74 {dimension_numbers = #tpu.dot_dimension_numbers<[1], [0], [0], [1], [0, 0, 1, 1], [], []>} : vector<16x128xbf16>, vector<128x128xbf16>, vector<16x128xf32> -> vector<16x128xf32>
    %c0_75 = arith.constant 0 : index
    %c0_76 = arith.constant 0 : index
    %140 = vector.load %arg18[%c0_75, %c0_76] : memref<1x128xf32, #tpu.memory_space<vmem>>, vector<1x128xf32>
    %c0_77 = arith.constant 0 : index
    %c0_78 = arith.constant 0 : index
    %141 = vector.load %arg19[%c0_77, %c0_78] : memref<1x128xf32, #tpu.memory_space<vmem>>, vector<1x128xf32>
    %cst_79 = arith.constant dense<0.000000e+00> : vector<128xf32>
    %142 = vector.multi_reduction <add>, %139, %cst_79 [0] : vector<16x128xf32> to vector<128xf32>
    %143 = vector.shape_cast %142 : vector<128xf32> to vector<1x128xf32>
    %144 = arith.mulf %139, %139 : vector<16x128xf32>
    %cst_80 = arith.constant dense<0.000000e+00> : vector<128xf32>
    %145 = vector.multi_reduction <add>, %144, %cst_80 [0] : vector<16x128xf32> to vector<128xf32>
    %146 = vector.shape_cast %145 : vector<128xf32> to vector<1x128xf32>
    %cst_81 = arith.constant 6.250000e-02 : f32
    %147 = vector.broadcast %cst_81 : f32 to vector<1x128xf32>
    %148 = arith.mulf %143, %147 : vector<1x128xf32>
    %cst_82 = arith.constant 6.250000e-02 : f32
    %149 = vector.broadcast %cst_82 : f32 to vector<1x128xf32>
    %150 = arith.mulf %146, %149 : vector<1x128xf32>
    %151 = arith.mulf %148, %148 : vector<1x128xf32>
    %152 = arith.subf %150, %151 : vector<1x128xf32>
    %cst_83 = arith.constant 0.000000e+00 : f32
    %153 = vector.broadcast %cst_83 : f32 to vector<1x128xf32>
    %154 = arith.maximumf %152, %153 : vector<1x128xf32>
    %155 = vector.broadcast %148 : vector<1x128xf32> to vector<16x128xf32>
    %156 = arith.subf %139, %155 : vector<16x128xf32>
    %cst_84 = arith.constant 9.99999974E-6 : f32
    %157 = vector.broadcast %cst_84 : f32 to vector<1x128xf32>
    %158 = arith.addf %154, %157 : vector<1x128xf32>
    %159 = math.rsqrt %158 : vector<1x128xf32>
    %160 = vector.broadcast %159 : vector<1x128xf32> to vector<16x128xf32>
    %161 = arith.mulf %156, %160 : vector<16x128xf32>
    %162 = vector.broadcast %140 : vector<1x128xf32> to vector<16x128xf32>
    %163 = arith.mulf %161, %162 : vector<16x128xf32>
    %164 = vector.broadcast %141 : vector<1x128xf32> to vector<16x128xf32>
    %165 = arith.addf %163, %164 : vector<16x128xf32>
    %cst_85 = arith.constant 0.000000e+00 : f32
    %166 = vector.broadcast %cst_85 : f32 to vector<16x128xf32>
    %167 = arith.maximumf %165, %166 : vector<16x128xf32>
    %c0_86 = arith.constant 0 : index
    %c0_87 = arith.constant 0 : index
    %168 = vector.load %arg20[%c0_86, %c0_87] : memref<16x128xf32, #tpu.memory_space<vmem>>, vector<16x128xf32>
    tpu.vector_store %arg20[%c0_86, %c0_87], %167 {strides = array<i32>} : memref<16x128xf32, #tpu.memory_space<vmem>>, vector<16x128xf32>,
    return
  }
}

</mosaic_0001>

<llo_original>
// kernel: tpu_custom_call.1
$region0: #{tpu_custom_call.1}
  #allocation0 [shape = 'u32[]', space=smem, size = 0x4, offset = 0x4, fixed_abs, tag = 'smem constant byte address 0x4 - core index']
  #allocation1 [shape = 'u32[144,128]{1,0:T(1,128)}', space=vmem, size = 0x12000, scoped, tag = 'internal scratch']
  %s0 = inlined_call_operand.vmem [shape: s32[48,1], index: 0, kind: input, shape index: {}]
  %s1 = inlined_call_operand.vmem [shape: s32[48,1], index: 1, kind: input, shape index: {}]
  %s2 = inlined_call_operand.hbm [shape: s32[1,48], index: 2, kind: input, shape index: {}]
  %s3 = inlined_call_operand.hbm [shape: f32[48,128], index: 3, kind: input, shape index: {}]
  %s4 = inlined_call_operand.hbm [shape: f32[16,128], index: 4, kind: input, shape index: {}]
  %s5 = inlined_call_operand.vmem [shape: bf16[128,128], index: 5, kind: input, shape index: {}]
  %s6 = inlined_call_operand.hbm [shape: bf16[128,128], index: 6, kind: input, shape index: {}]
  %s7 = inlined_call_operand.hbm [shape: bf16[128,128], index: 7, kind: input, shape index: {}]
  %s8 = inlined_call_operand.hbm [shape: f32[1,128], index: 8, kind: input, shape index: {}]
  %s9 = inlined_call_operand.vmem [shape: f32[1,128], index: 9, kind: input, shape index: {}]
  %s10 = inlined_call_operand.vmem [shape: bf16[128,128], index: 10, kind: input, shape index: {}]
  %s11 = inlined_call_operand.vmem [shape: f32[1,128], index: 11, kind: input, shape index: {}]
  %s12 = inlined_call_operand.vmem [shape: f32[1,128], index: 12, kind: input, shape index: {}]
  %s13 = inlined_call_operand.hbm [shape: bf16[128,128], index: 13, kind: input, shape index: {}]
  %s14 = inlined_call_operand.hbm [shape: bf16[128,128], index: 14, kind: input, shape index: {}]
  %s15 = inlined_call_operand.vmem [shape: f32[1,128], index: 15, kind: input, shape index: {}]
  %s16 = inlined_call_operand.vmem [shape: f32[1,128], index: 16, kind: input, shape index: {}]
  %s17 = inlined_call_operand.hbm [shape: bf16[128,128], index: 17, kind: input, shape index: {}]
  %s18 = inlined_call_operand.vmem [shape: f32[1,128], index: 18, kind: input, shape index: {}]
  %s19 = inlined_call_operand.vmem [shape: f32[1,128], index: 19, kind: input, shape index: {}]
  %s20 = inlined_call_operand.hbm [shape: f32[16,128], index: 20, kind: output, shape index: {0}]
  %s21 = inlined_call_operand.hbm [shape: f32[48,128], index: 21, kind: output, shape index: {1}]
  %22 = xla_tuple %s20, %s21
  %s23 = sld [smem:[#allocation0]]
  $region134: #{tpu_custom_call.1} parent=0
    _
  %s25 = ssub.s32 1, %s23
  %s26 = scalar_select 0, %s25, %s23
  $region1: #{tpu_custom_call.1} parent=0
    #allocation2 [shape = 'u8[512]{0}', space=vmem, size = 0x400, scoped, tag = 'input window, operand 2, single buffered']
    #allocation3 [shape = 's32[1]{0}', space=sflag, size = 0x4, scoped, tag = 'scoped memory for tpu_custom_call.1']
    #allocation4 [shape = 's32[1]{0}', space=sflag, size = 0x4, scoped, tag = 'scoped memory for tpu_custom_call.1']
    #allocation5 [shape = 'u8[24576]{0}', space=vmem, size = 0x6000, scoped, tag = 'input window, operand 3, single buffered']
    #allocation6 [shape = 's32[1]{0}', space=sflag, size = 0x4, scoped, tag = 'scoped memory for tpu_custom_call.1']
    #allocation7 [shape = 'u8[8192]{0}', space=vmem, size = 0x2000, scoped, tag = 'input window, operand 4, single buffered']
    #allocation8 [shape = 'u8[32768]{0}', space=vmem, size = 0x8000, scoped, tag = 'input window, operand 6, single buffered']
    #allocation9 [shape = 's32[1]{0}', space=sflag, size = 0x4, scoped, tag = 'scoped memory for tpu_custom_call.1']
    #allocation10 [shape = 'u8[32768]{0}', space=vmem, size = 0x8000, scoped, tag = 'input window, operand 7, single buffered']
    #allocation11 [shape = 'u8[512]{0}', space=vmem, size = 0x400, scoped, tag = 'input window, operand 8, single buffered']
    #allocation12 [shape = 's32[1]{0}', space=sflag, size = 0x4, scoped, tag = 'scoped memory for tpu_custom_call.1']
    #allocation13 [shape = 'u8[32768]{0}', space=vmem, size = 0x8000, scoped, tag = 'input window, operand 13, single buffered']
    #allocation14 [shape = 'u8[32768]{0}', space=vmem, size = 0x8000, scoped, tag = 'input window, operand 14, single buffered']
    #allocation15 [shape = 's32[1]{0}', space=sflag, size = 0x4, scoped, tag = 'scoped memory for tpu_custom_call.1']
    #allocation16 [shape = 'u8[32768]{0}', space=vmem, size = 0x8000, scoped, tag = 'input window, operand 17, single buffered']
    #allocation17 [shape = 'u8[8192]{0}', space=vmem, size = 0x2000, scoped, tag = 'output window, operand 0, single buffered']
    #allocation18 [shape = 'u8[24576]{0}', space=vmem, size = 0x6000, scoped, tag = 'output window, operand 1, single buffered']
    #allocation19 [shape = 's32[1]{0}', space=sflag, size = 0x4, scoped, tag = 'scoped memory for tpu_custom_call.1']
    %27 = vsyncpa [#allocation3], 0
    %28 = vsyncpa [#allocation6], 0
    %29 = vsyncpa [#allocation9], 0
    %30 = vsyncpa [#allocation12], 0
    %31 = vsyncpa [#allocation15], 0
    %32 = vsyncpa [#allocation4], 0
    %33 = vsyncpa [#allocation19], 0
    // Predicated region
    $region2: #{tpu_custom_call.1} parent=1 // pred_check
      _
    $region3: #{tpu_custom_call.1} parent=1 // pred_check_branch
      %35 = sbr.rel (0) target = $region5
    $region4: #{tpu_custom_call.1} parent=1 // pred_region
      _
    $region5: #{tpu_custom_call.1} parent=1 // pred_fallthru
      _
    // Predicated region
    $region6: #{tpu_custom_call.1} parent=1 // pred_check
      _
    $region7: #{tpu_custom_call.1} parent=1 // pred_check_branch
      %37 = sbr.rel (0) target = $region9
    $region8: #{tpu_custom_call.1} parent=1 // pred_region
      _
    $region9: #{tpu_custom_call.1} parent=1 // pred_fallthru
      _
    // Predicated region
    $region10: #{tpu_custom_call.1} parent=1 // pred_check
      _
    $region11: #{tpu_custom_call.1} parent=1 // pred_check_branch
      %39 = sbr.rel (0) target = $region13
    $region12: #{tpu_custom_call.1} parent=1 // pred_region
      %s41 = ssub.s32 16, 16
      %42 = vsyncadd [#allocation3], %s41
      %s44 = sshll.u32 [#allocation2], 4
      %s45 = int_to_ptr.vmem [resolvable:$true] %s44
      %47 = dma.hbm_to_vmem [thread:$0]  %s2, 16, %s45, [#allocation3]
    $region13: #{tpu_custom_call.1} parent=1 // pred_fallthru
      _
    // Predicated region
    $region14: #{tpu_custom_call.1} parent=1 // pred_check
      _
    $region15: #{tpu_custom_call.1} parent=1 // pred_check_branch
      %49 = sbr.rel (0) target = $region17
    $region16: #{tpu_custom_call.1} parent=1 // pred_region
      %s51 = ssub.s32 768, 768
      %52 = vsyncadd [#allocation6], %s51
      %s53 = sshll.u32 [#allocation5], 4
      %s54 = int_to_ptr.vmem [resolvable:$true] %s53
      %59 = dma.hbm_to_vmem [thread:$0]  %s3, 768, %s54, [#allocation6], 128, 128, 8
    $region17: #{tpu_custom_call.1} parent=1 // pred_fallthru
      _
    // Predicated region
    $region18: #{tpu_custom_call.1} parent=1 // pred_check
      _
    $region19: #{tpu_custom_call.1} parent=1 // pred_check_branch
      %61 = sbr.rel (0) target = $region21
    $region20: #{tpu_custom_call.1} parent=1 // pred_region
      %s63 = ssub.s32 256, 256
      %64 = vsyncadd [#allocation6], %s63
      %s65 = sshll.u32 [#allocation7], 4
      %s66 = int_to_ptr.vmem [resolvable:$true] %s65
      %71 = dma.hbm_to_vmem [thread:$0]  %s4, 256, %s66, [#allocation6], 128, 128, 8
    $region21: #{tpu_custom_call.1} parent=1 // pred_fallthru
      _
    // Predicated region
    $region22: #{tpu_custom_call.1} parent=1 // pred_check
      _
    $region23: #{tpu_custom_call.1} parent=1 // pred_check_branch
      %73 = sbr.rel (0) target = $region25
    $region24: #{tpu_custom_call.1} parent=1 // pred_region
      _
    $region25: #{tpu_custom_call.1} parent=1 // pred_fallthru
      _
    // Predicated region
    $region26: #{tpu_custom_call.1} parent=1 // pred_check
      _
    $region27: #{tpu_custom_call.1} parent=1 // pred_check_branch
      %75 = sbr.rel (0) target = $region29
    $region28: #{tpu_custom_call.1} parent=1 // pred_region
      %s77 = ssub.s32 1024, 1024
      %78 = vsyncadd [#allocation9], %s77
      %s79 = sshll.u32 [#allocation8], 4
      %s80 = int_to_ptr.vmem [resolvable:$true] %s79
      %85 = dma.hbm_to_vmem [thread:$0]  %s6, 1024, %s80, [#allocation9], 64, 64, 4
    $region29: #{tpu_custom_call.1} parent=1 // pred_fallthru
      _
    // Predicated region
    $region30: #{tpu_custom_call.1} parent=1 // pred_check
      _
    $region31: #{tpu_custom_call.1} parent=1 // pred_check_branch
      %87 = sbr.rel (0) target = $region33
    $region32: #{tpu_custom_call.1} parent=1 // pred_region
      %s89 = ssub.s32 1024, 1024
      %90 = vsyncadd [#allocation9], %s89
      %s91 = sshll.u32 [#allocation10], 4
      %s92 = int_to_ptr.vmem [resolvable:$true] %s91
      %97 = dma.hbm_to_vmem [thread:$0]  %s7, 1024, %s92, [#allocation9], 64, 64, 4
    $region33: #{tpu_custom_call.1} parent=1 // pred_fallthru
      _
    // Predicated region
    $region34: #{tpu_custom_call.1} parent=1 // pred_check
      _
    $region35: #{tpu_custom_call.1} parent=1 // pred_check_branch
      %99 = sbr.rel (0) target = $region37
    $region36: #{tpu_custom_call.1} parent=1 // pred_region
      %s101 = ssub.s32 16, 16
      %102 = vsyncadd [#allocation12], %s101
      %s104 = sshll.u32 [#allocation11], 4
      %s105 = int_to_ptr.vmem [resolvable:$true] %s104
      %107 = dma.hbm_to_vmem [thread:$0]  %s8, 16, %s105, [#allocation12]
    $region37: #{tpu_custom_call.1} parent=1 // pred_fallthru
      _
    // Predicated region
    $region38: #{tpu_custom_call.1} parent=1 // pred_check
      _
    $region39: #{tpu_custom_call.1} parent=1 // pred_check_branch
      %109 = sbr.rel (0) target = $region41
    $region40: #{tpu_custom_call.1} parent=1 // pred_region
      _
    $region41: #{tpu_custom_call.1} parent=1 // pred_fallthru
      _
    // Predicated region
    $region42: #{tpu_custom_call.1} parent=1 // pred_check
      _
    $region43: #{tpu_custom_call.1} parent=1 // pred_check_branch
      %111 = sbr.rel (0) target = $region45
    $region44: #{tpu_custom_call.1} parent=1 // pred_region
      _
    $region45: #{tpu_custom_call.1} parent=1 // pred_fallthru
      _
    // Predicated region
    $region46: #{tpu_custom_call.1} parent=1 // pred_check
      _
    $region47: #{tpu_custom_call.1} parent=1 // pred_check_branch
      %113 = sbr.rel (0) target = $region49
    $region48: #{tpu_custom_call.1} parent=1 // pred_region
      _
    $region49: #{tpu_custom_call.1} parent=1 // pred_fallthru
      _
    // Predicated region
    $region50: #{tpu_custom_call.1} parent=1 // pred_check
      _
    $region51: #{tpu_custom_call.1} parent=1 // pred_check_branch
      %115 = sbr.rel (0) target = $region53
    $region52: #{tpu_custom_call.1} parent=1 // pred_region
      _
    $region53: #{tpu_custom_call.1} parent=1 // pred_fallthru
      _
    // Predicated region
    $region54: #{tpu_custom_call.1} parent=1 // pred_check
      _
    $region55: #{tpu_custom_call.1} parent=1 // pred_check_branch
      %117 = sbr.rel (0) target = $region57
    $region56: #{tpu_custom_call.1} parent=1 // pred_region
      %s119 = ssub.s32 1024, 1024
      %120 = vsyncadd [#allocation12], %s119
      %s121 = sshll.u32 [#allocation13], 4
      %s122 = int_to_ptr.vmem [resolvable:$true] %s121
      %127 = dma.hbm_to_vmem [thread:$0]  %s13, 1024, %s122, [#allocation12], 64, 64, 4
    $region57: #{tpu_custom_call.1} parent=1 // pred_fallthru
      _
    // Predicated region
    $region58: #{tpu_custom_call.1} parent=1 // pred_check
      _
    $region59: #{tpu_custom_call.1} parent=1 // pred_check_branch
      %129 = sbr.rel (0) target = $region61
    $region60: #{tpu_custom_call.1} parent=1 // pred_region
      %s131 = ssub.s32 1024, 1024
      %132 = vsyncadd [#allocation15], %s131
      %s133 = sshll.u32 [#allocation14], 4
      %s134 = int_to_ptr.vmem [resolvable:$true] %s133
      %139 = dma.hbm_to_vmem [thread:$0]  %s14, 1024, %s134, [#allocation15], 64, 64, 4
    $region61: #{tpu_custom_call.1} parent=1 // pred_fallthru
      _
    // Predicated region
    $region62: #{tpu_custom_call.1} parent=1 // pred_check
      _
    $region63: #{tpu_custom_call.1} parent=1 // pred_check_branch
      %141 = sbr.rel (0) target = $region65
    $region64: #{tpu_custom_call.1} parent=1 // pred_region
      _
    $region65: #{tpu_custom_call.1} parent=1 // pred_fallthru
      _
    // Predicated region
    $region66: #{tpu_custom_call.1} parent=1 // pred_check
      _
    $region67: #{tpu_custom_call.1} parent=1 // pred_check_branch
      %143 = sbr.rel (0) target = $region69
    $region68: #{tpu_custom_call.1} parent=1 // pred_region
      _
    $region69: #{tpu_custom_call.1} parent=1 // pred_fallthru
      _
    // Predicated region
    $region70: #{tpu_custom_call.1} parent=1 // pred_check
      _
    $region71: #{tpu_custom_call.1} parent=1 // pred_check_branch
      %145 = sbr.rel (0) target = $region73
    $region72: #{tpu_custom_call.1} parent=1 // pred_region
      %s147 = ssub.s32 1024, 1024
      %148 = vsyncadd [#allocation15], %s147
      %s149 = sshll.u32 [#allocation16], 4
      %s150 = int_to_ptr.vmem [resolvable:$true] %s149
      %155 = dma.hbm_to_vmem [thread:$0]  %s17, 1024, %s150, [#allocation15], 64, 64, 4
    $region73: #{tpu_custom_call.1} parent=1 // pred_fallthru
      _
    // Predicated region
    $region74: #{tpu_custom_call.1} parent=1 // pred_check
      _
    $region75: #{tpu_custom_call.1} parent=1 // pred_check_branch
      %157 = sbr.rel (0) target = $region77
    $region76: #{tpu_custom_call.1} parent=1 // pred_region
      _
    $region77: #{tpu_custom_call.1} parent=1 // pred_fallthru
      _
    // Predicated region
    $region78: #{tpu_custom_call.1} parent=1 // pred_check
      _
    $region79: #{tpu_custom_call.1} parent=1 // pred_check_branch
      %159 = sbr.rel (0) target = $region81
    $region80: #{tpu_custom_call.1} parent=1 // pred_region
      _
    $region81: #{tpu_custom_call.1} parent=1 // pred_fallthru
      _
    // Predicated region
    $region82: #{tpu_custom_call.1} parent=1 // pred_check
      _
    $region83: #{tpu_custom_call.1} parent=1 // pred_check_branch
      %161 = sbr.rel (0) target = $region85
    $region84: #{tpu_custom_call.1} parent=1 // pred_region
      %162 = dma.done [#allocation3], 16
    $region85: #{tpu_custom_call.1} parent=1 // pred_fallthru
      _
    // Predicated region
    $region86: #{tpu_custom_call.1} parent=1 // pred_check
      _
    $region87: #{tpu_custom_call.1} parent=1 // pred_check_branch
      %164 = sbr.rel (0) target = $region89
    $region88: #{tpu_custom_call.1} parent=1 // pred_region
      %165 = dma.done [#allocation6], 768
    $region89: #{tpu_custom_call.1} parent=1 // pred_fallthru
      _
    // Predicated region
    $region90: #{tpu_custom_call.1} parent=1 // pred_check
      _
    $region91: #{tpu_custom_call.1} parent=1 // pred_check_branch
      %167 = sbr.rel (0) target = $region93
    $region92: #{tpu_custom_call.1} parent=1 // pred_region
      %168 = dma.done [#allocation6], 256
    $region93: #{tpu_custom_call.1} parent=1 // pred_fallthru
      _
    // Predicated region
    $region94: #{tpu_custom_call.1} parent=1 // pred_check
      _
    $region95: #{tpu_custom_call.1} parent=1 // pred_check_branch
      %170 = sbr.rel (0) target = $region97
    $region96: #{tpu_custom_call.1} parent=1 // pred_region
      %171 = dma.done [#allocation9], 1024
    $region97: #{tpu_custom_call.1} parent=1 // pred_fallthru
      _
    // Predicated region
    $region98: #{tpu_custom_call.1} parent=1 // pred_check
      _
    $region99: #{tpu_custom_call.1} parent=1 // pred_check_branch
      %173 = sbr.rel (0) target = $region101
    $region100: #{tpu_custom_call.1} parent=1 // pred_region
      %174 = dma.done [#allocation9], 1024
    $region101: #{tpu_custom_call.1} parent=1 // pred_fallthru
      _
    // Predicated region
    $region102: #{tpu_custom_call.1} parent=1 // pred_check
      _
    $region103: #{tpu_custom_call.1} parent=1 // pred_check_branch
      %176 = sbr.rel (0) target = $region105
    $region104: #{tpu_custom_call.1} parent=1 // pred_region
      %177 = dma.done [#allocation12], 16
    $region105: #{tpu_custom_call.1} parent=1 // pred_fallthru
      _
    // Predicated region
    $region106: #{tpu_custom_call.1} parent=1 // pred_check
      _
    $region107: #{tpu_custom_call.1} parent=1 // pred_check_branch
      %179 = sbr.rel (0) target = $region109
    $region108: #{tpu_custom_call.1} parent=1 // pred_region
      %180 = dma.done [#allocation12], 1024
    $region109: #{tpu_custom_call.1} parent=1 // pred_fallthru
      _
    // Predicated region
    $region110: #{tpu_custom_call.1} parent=1 // pred_check
      _
    $region111: #{tpu_custom_call.1} parent=1 // pred_check_branch
      %182 = sbr.rel (0) target = $region113
    $region112: #{tpu_custom_call.1} parent=1 // pred_region
      %183 = dma.done [#allocation15], 1024
    $region113: #{tpu_custom_call.1} parent=1 // pred_fallthru
      _
    // Predicated region
    $region114: #{tpu_custom_call.1} parent=1 // pred_check
      _
    $region115: #{tpu_custom_call.1} parent=1 // pred_check_branch
      %185 = sbr.rel (0) target = $region117
    $region116: #{tpu_custom_call.1} parent=1 // pred_region
      %186 = dma.done [#allocation15], 1024
    $region117: #{tpu_custom_call.1} parent=1 // pred_fallthru
      _
    %v188 = vld [vmem:[#allocation7] sm:$0xff]
    %v189 = vld [vmem:[#allocation7 + $0x8] sm:$0xff]
    %v190 = vpack.c.bf16 %v189, %v188
    %v191 = vlaneseq
    %v192 = vand.u32 %v191, 127
    %v193 = vld [vmem:[%s0] sm:$0xff]
    %v194 = vld [vmem:[%s0 + $0x8] sm:$0xff]
    %v195 = vld [vmem:[%s0 + $0x10] sm:$0xff]
    %v196 = vld [vmem:[%s0 + $0x18] sm:$0xff]
    %v197 = vld [vmem:[%s0 + $0x20] sm:$0xff]
    %v198 = vld [vmem:[%s0 + $0x28] sm:$0xff]
    %199 = vset.pattern.permute.xlu0 0
    %200 = vperm.xlu0 %199, %v193
    %v201 = vpop.permute.xlu0 %200
    %202 = vset.pattern.permute.xlu0 0
    %203 = vperm.xlu0 %202, %v194
    %v204 = vpop.permute.xlu0 %203
    %205 = vset.pattern.permute.xlu0 0
    %206 = vperm.xlu0 %205, %v195
    %v207 = vpop.permute.xlu0 %206
    %208 = vset.pattern.permute.xlu0 0
    %209 = vperm.xlu0 %208, %v196
    %v210 = vpop.permute.xlu0 %209
    %211 = vset.pattern.permute.xlu0 0
    %212 = vperm.xlu0 %211, %v197
    %v213 = vpop.permute.xlu0 %212
    %214 = vset.pattern.permute.xlu0 0
    %215 = vperm.xlu0 %214, %v198
    %v216 = vpop.permute.xlu0 %215
    %vm217 = vcmp.eq.s32.totalorder %v192, %v201
    %vm218 = vcmp.eq.s32.totalorder %v192, %v204
    %vm219 = vcmp.eq.s32.totalorder %v192, %v207
    %vm220 = vcmp.eq.s32.totalorder %v192, %v210
    %vm221 = vcmp.eq.s32.totalorder %v192, %v213
    %vm222 = vcmp.eq.s32.totalorder %v192, %v216
    %v223 = vsel %vm217, 1.0, 0.0
    %v224 = vsel %vm218, 1.0, 0.0
    %v225 = vsel %vm219, 1.0, 0.0
    %v226 = vsel %vm220, 1.0, 0.0
    %v227 = vsel %vm221, 1.0, 0.0
    %v228 = vsel %vm222, 1.0, 0.0
    %v229 = vpack.c.bf16 %v224, %v223
    %v230 = vpack.c.bf16 %v226, %v225
    %v231 = vpack.c.bf16 %v228, %v227
    %v232 = vld [vmem:[%s1] sm:$0xff]
    %v233 = vld [vmem:[%s1 + $0x8] sm:$0xff]
    %v234 = vld [vmem:[%s1 + $0x10] sm:$0xff]
    %v235 = vld [vmem:[%s1 + $0x18] sm:$0xff]
    %v236 = vld [vmem:[%s1 + $0x20] sm:$0xff]
    %v237 = vld [vmem:[%s1 + $0x28] sm:$0xff]
    %238 = vset.pattern.permute.xlu0 0
    %239 = vperm.xlu0 %238, %v232
    %v240 = vpop.permute.xlu0 %239
    %241 = vset.pattern.permute.xlu0 0
    %242 = vperm.xlu0 %241, %v233
    %v243 = vpop.permute.xlu0 %242
    %244 = vset.pattern.permute.xlu0 0
    %245 = vperm.xlu0 %244, %v234
    %v246 = vpop.permute.xlu0 %245
    %247 = vset.pattern.permute.xlu0 0
    %248 = vperm.xlu0 %247, %v235
    %v249 = vpop.permute.xlu0 %248
    %250 = vset.pattern.permute.xlu0 0
    %251 = vperm.xlu0 %250, %v236
    %v252 = vpop.permute.xlu0 %251
    %253 = vset.pattern.permute.xlu0 0
    %254 = vperm.xlu0 %253, %v237
    %v255 = vpop.permute.xlu0 %254
    %vm256 = vcmp.eq.s32.totalorder %v192, %v240
    %vm257 = vcmp.eq.s32.totalorder %v192, %v243
    %vm258 = vcmp.eq.s32.totalorder %v192, %v246
    %vm259 = vcmp.eq.s32.totalorder %v192, %v249
    %vm260 = vcmp.eq.s32.totalorder %v192, %v252
    %vm261 = vcmp.eq.s32.totalorder %v192, %v255
    %v262 = vsel %vm256, 1.0, 0.0
    %v263 = vsel %vm257, 1.0, 0.0
    %v264 = vsel %vm258, 1.0, 0.0
    %v265 = vsel %vm259, 1.0, 0.0
    %v266 = vsel %vm260, 1.0, 0.0
    %v267 = vsel %vm261, 1.0, 0.0
    %v268 = vpack.c.bf16 %v263, %v262
    %v269 = vpack.c.bf16 %v265, %v264
    %v270 = vpack.c.bf16 %v267, %v266
    %vm271 = vcmask 130048
    %v273 = vsel %vm271, %v229, 0
    %v276 = vsel %vm271, %v230, 0
    %v279 = vsel %vm271, %v231, 0
    %281 = vmatprep.subr.bf16.mxu0 0
    %282 = vmatpush1.bf16.msra.mxu0 %v190
    %283 = vmatprep.subr.bf16.mxu0 0
    %284 = vmatpush1.bf16.msra.mxu0 0
    %285 = vmatprep.subr.bf16.mxu0 0
    %286 = vmatpush1.bf16.msra.mxu0 0
    %287 = vmatprep.subr.bf16.mxu0 0
    %288 = vmatpush1.bf16.msra.mxu0 0
    %289 = vmatprep.subr.bf16.mxu0 0
    %290 = vmatpush1.bf16.msra.mxu0 0
    %291 = vmatprep.subr.bf16.mxu0 0
    %292 = vmatpush1.bf16.msra.mxu0 0
    %293 = vmatprep.subr.bf16.mxu0 0
    %294 = vmatpush1.bf16.msra.mxu0 0
    %295 = vmatprep.subr.bf16.mxu0 0
    %296 = vmatpush1.bf16.msra.mxu0 0
    %297 = vmatprep.subr.bf16.mxu0 0
    %298 = vmatpush1.bf16.msra.mxu0 0
    %299 = vmatprep.subr.bf16.mxu0 0
    %300 = vmatpush1.bf16.msra.mxu0 0
    %301 = vmatprep.subr.bf16.mxu0 0
    %302 = vmatpush1.bf16.msra.mxu0 0
    %303 = vmatprep.subr.bf16.mxu0 0
    %304 = vmatpush1.bf16.msra.mxu0 0
    %305 = vmatprep.subr.bf16.mxu0 0
    %306 = vmatpush1.bf16.msra.mxu0 0
    %307 = vmatprep.subr.bf16.mxu0 0
    %308 = vmatpush1.bf16.msra.mxu0 0
    %309 = vmatprep.subr.bf16.mxu0 0
    %310 = vmatpush1.bf16.msra.mxu0 0
    %311 = vmatprep.subr.bf16.mxu0 0
    %312 = vmatpush1.bf16.msra.mxu0 0
    %313 = vmatprep.mubr.bf16.mxu0 0
    %314 = vmatmul.mubr.bf16.gmra.mrb[0].mxu0 %v273
    %v315 = vpop.f32.mrb[0].mxu0
    %v316 = vadd.f32 0.0, %v315
    %v317 = vpop.f32.mrb[0].mxu0
    %v318 = vpop.f32.mrb[0].mxu0
    %v319 = vadd.f32 0.0, %v318
    %v320 = vpop.f32.mrb[0].mxu0
    %321 = vmatprep.mubr.bf16.mxu0 0
    %322 = vmatmul.mubr.bf16.gmra.mrb[0].mxu0 %v276
    %v323 = vpop.f32.mrb[0].mxu0
    %v324 = vadd.f32 0.0, %v323
    %v325 = vpop.f32.mrb[0].mxu0
    %v326 = vpop.f32.mrb[0].mxu0
    %v327 = vadd.f32 0.0, %v326
    %v328 = vpop.f32.mrb[0].mxu0
    %329 = vmatprep.mubr.bf16.mxu0 0
    %330 = vmatmul.mubr.bf16.gmra.mrb[0].mxu0 %v279
    %v331 = vpop.f32.mrb[0].mxu0
    %v332 = vadd.f32 0.0, %v331
    %v333 = vpop.f32.mrb[0].mxu0
    %v334 = vpop.f32.mrb[0].mxu0
    %v335 = vadd.f32 0.0, %v334
    %v336 = vpop.f32.mrb[0].mxu0
    %337 = vdwg.mxu0
    %v339 = vsel %vm271, %v268, 0
    %v342 = vsel %vm271, %v269, 0
    %v345 = vsel %vm271, %v270, 0
    %347 = vmatprep.subr.bf16.mxu0 0
    %348 = vmatpush1.bf16.msra.mxu0 %v190
    %349 = vmatprep.subr.bf16.mxu0 0
    %350 = vmatpush1.bf16.msra.mxu0 0
    %351 = vmatprep.subr.bf16.mxu0 0
    %352 = vmatpush1.bf16.msra.mxu0 0
    %353 = vmatprep.subr.bf16.mxu0 0
    %354 = vmatpush1.bf16.msra.mxu0 0
    %355 = vmatprep.subr.bf16.mxu0 0
    %356 = vmatpush1.bf16.msra.mxu0 0
    %357 = vmatprep.subr.bf16.mxu0 0
    %358 = vmatpush1.bf16.msra.mxu0 0
    %359 = vmatprep.subr.bf16.mxu0 0
    %360 = vmatpush1.bf16.msra.mxu0 0
    %361 = vmatprep.subr.bf16.mxu0 0
    %362 = vmatpush1.bf16.msra.mxu0 0
    %363 = vmatprep.subr.bf16.mxu0 0
    %364 = vmatpush1.bf16.msra.mxu0 0
    %365 = vmatprep.subr.bf16.mxu0 0
    %366 = vmatpush1.bf16.msra.mxu0 0
    %367 = vmatprep.subr.bf16.mxu0 0
    %368 = vmatpush1.bf16.msra.mxu0 0
    %369 = vmatprep.subr.bf16.mxu0 0
    %370 = vmatpush1.bf16.msra.mxu0 0
    %371 = vmatprep.subr.bf16.mxu0 0
    %372 = vmatpush1.bf16.msra.mxu0 0
    %373 = vmatprep.subr.bf16.mxu0 0
    %374 = vmatpush1.bf16.msra.mxu0 0
    %375 = vmatprep.subr.bf16.mxu0 0
    %376 = vmatpush1.bf16.msra.mxu0 0
    %377 = vmatprep.subr.bf16.mxu0 0
    %378 = vmatpush1.bf16.msra.mxu0 0
    %379 = vmatprep.mubr.bf16.mxu0 0
    %380 = vmatmul.mubr.bf16.gmra.mrb[0].mxu0 %v339
    %v381 = vpop.f32.mrb[0].mxu0
    %v382 = vadd.f32 0.0, %v381
    %v383 = vpop.f32.mrb[0].mxu0
    %v384 = vpop.f32.mrb[0].mxu0
    %v385 = vadd.f32 0.0, %v384
    %v386 = vpop.f32.mrb[0].mxu0
    %387 = vmatprep.mubr.bf16.mxu0 0
    %388 = vmatmul.mubr.bf16.gmra.mrb[0].mxu0 %v342
    %v389 = vpop.f32.mrb[0].mxu0
    %v390 = vadd.f32 0.0, %v389
    %v391 = vpop.f32.mrb[0].mxu0
    %v392 = vpop.f32.mrb[0].mxu0
    %v393 = vadd.f32 0.0, %v392
    %v394 = vpop.f32.mrb[0].mxu0
    %395 = vmatprep.mubr.bf16.mxu0 0
    %396 = vmatmul.mubr.bf16.gmra.mrb[0].mxu0 %v345
    %v397 = vpop.f32.mrb[0].mxu0
    %v398 = vadd.f32 0.0, %v397
    %v399 = vpop.f32.mrb[0].mxu0
    %v400 = vpop.f32.mrb[0].mxu0
    %v401 = vadd.f32 0.0, %v400
    %v402 = vpop.f32.mrb[0].mxu0
    %403 = vdwg.mxu0
    %v404 = vld [vmem:[#allocation5] sm:$0xff]
    %v405 = vld [vmem:[#allocation5 + $0x8] sm:$0xff]
    %v406 = vld [vmem:[#allocation5 + $0x10] sm:$0xff]
    %v407 = vld [vmem:[#allocation5 + $0x18] sm:$0xff]
    %v408 = vld [vmem:[#allocation5 + $0x20] sm:$0xff]
    %v409 = vld [vmem:[#allocation5 + $0x28] sm:$0xff]
    %v410 = vld [vmem:[%s5] sm:$0xf]
    %v411 = vld [vmem:[%s5 + $0x4] sm:$0xf]
    %v412 = vld [vmem:[%s5 + $0x8] sm:$0xf]
    %v413 = vld [vmem:[%s5 + $0xc] sm:$0xf]
    %v414 = vld [vmem:[%s5 + $0x10] sm:$0xf]
    %v415 = vld [vmem:[%s5 + $0x14] sm:$0xf]
    %v416 = vld [vmem:[%s5 + $0x18] sm:$0xf]
    %v417 = vld [vmem:[%s5 + $0x1c] sm:$0xf]
    %v418 = vld [vmem:[%s5 + $0x20] sm:$0xf]
    %v419 = vld [vmem:[%s5 + $0x24] sm:$0xf]
    %v420 = vld [vmem:[%s5 + $0x28] sm:$0xf]
    %v421 = vld [vmem:[%s5 + $0x2c] sm:$0xf]
    %v422 = vld [vmem:[%s5 + $0x30] sm:$0xf]
    %v423 = vld [vmem:[%s5 + $0x34] sm:$0xf]
    %v424 = vld [vmem:[%s5 + $0x38] sm:$0xf]
    %v425 = vld [vmem:[%s5 + $0x3c] sm:$0xf]
    %v426 = vpack.c.bf16 %v405, %v404
    %v427 = vpack.c.bf16 %v407, %v406
    %v428 = vpack.c.bf16 %v409, %v408
    %v429 = vld [vmem:[#allocation8] sm:$0xf]
    %v430 = vld [vmem:[#allocation8 + $0x4] sm:$0xf]
    %v431 = vld [vmem:[#allocation8 + $0x8] sm:$0xf]
    %v432 = vld [vmem:[#allocation8 + $0xc] sm:$0xf]
    %v433 = vld [vmem:[#allocation8 + $0x10] sm:$0xf]
    %v434 = vld [vmem:[#allocation8 + $0x14] sm:$0xf]
    %v435 = vld [vmem:[#allocation8 + $0x18] sm:$0xf]
    %v436 = vld [vmem:[#allocation8 + $0x1c] sm:$0xf]
    %v437 = vld [vmem:[#allocation8 + $0x20] sm:$0xf]
    %v438 = vld [vmem:[#allocation8 + $0x24] sm:$0xf]
    %v439 = vld [vmem:[#allocation8 + $0x28] sm:$0xf]
    %v440 = vld [vmem:[#allocation8 + $0x2c] sm:$0xf]
    %v441 = vld [vmem:[#allocation8 + $0x30] sm:$0xf]
    %v442 = vld [vmem:[#allocation8 + $0x34] sm:$0xf]
    %v443 = vld [vmem:[#allocation8 + $0x38] sm:$0xf]
    %v444 = vld [vmem:[#allocation8 + $0x3c] sm:$0xf]
    %v445 = vpack.c.bf16 %v319, %v316
    %v446 = vpack.c.bf16 %v327, %v324
    %v447 = vpack.c.bf16 %v335, %v332
    %v464 = vunpack.c.l.b16 %v429
    %v465 = vunpack.c.l.b16 %v430
    %v466 = vunpack.c.l.b16 %v431
    %v467 = vunpack.c.l.b16 %v432
    %v468 = vunpack.c.l.b16 %v433
    %v469 = vunpack.c.l.b16 %v434
    %v470 = vunpack.c.l.b16 %v435
    %v471 = vunpack.c.l.b16 %v436
    %v472 = vunpack.c.l.b16 %v437
    %v473 = vunpack.c.l.b16 %v438
    %v474 = vunpack.c.l.b16 %v439
    %v475 = vunpack.c.l.b16 %v440
    %v476 = vunpack.c.l.b16 %v441
    %v477 = vunpack.c.l.b16 %v442
    %v478 = vunpack.c.l.b16 %v443
    %v479 = vunpack.c.l.b16 %v444
    %v480 = vpack.c.b16 %v465, %v464
    %v481 = vpack.c.b16 %v467, %v466
    %v482 = vpack.c.b16 %v469, %v468
    %v483 = vpack.c.b16 %v471, %v470
    %v484 = vpack.c.b16 %v473, %v472
    %v485 = vpack.c.b16 %v475, %v474
    %v486 = vpack.c.b16 %v477, %v476
    %v487 = vpack.c.b16 %v479, %v478
    %496 = vmatprep.subr.bf16.mxu0 0
    %497 = vmatpush1.bf16.msra.mxu0 %v480
    %498 = vmatprep.subr.bf16.mxu0 0
    %499 = vmatpush1.bf16.msra.mxu0 %v481
    %500 = vmatprep.subr.bf16.mxu0 0
    %501 = vmatpush1.bf16.msra.mxu0 %v482
    %502 = vmatprep.subr.bf16.mxu0 0
    %503 = vmatpush1.bf16.msra.mxu0 %v483
    %504 = vmatprep.subr.bf16.mxu0 0
    %505 = vmatpush1.bf16.msra.mxu0 %v484
    %506 = vmatprep.subr.bf16.mxu0 0
    %507 = vmatpush1.bf16.msra.mxu0 %v485
    %508 = vmatprep.subr.bf16.mxu0 0
    %509 = vmatpush1.bf16.msra.mxu0 %v486
    %510 = vmatprep.subr.bf16.mxu0 0
    %511 = vmatpush1.bf16.msra.mxu0 %v487
    %512 = vmatprep.subr.bf16.mxu0 0
    %513 = vmatpush1.bf16.msra.mxu0 0
    %514 = vmatprep.subr.bf16.mxu0 0
    %515 = vmatpush1.bf16.msra.mxu0 0
    %516 = vmatprep.subr.bf16.mxu0 0
    %517 = vmatpush1.bf16.msra.mxu0 0
    %518 = vmatprep.subr.bf16.mxu0 0
    %519 = vmatpush1.bf16.msra.mxu0 0
    %520 = vmatprep.subr.bf16.mxu0 0
    %521 = vmatpush1.bf16.msra.mxu0 0
    %522 = vmatprep.subr.bf16.mxu0 0
    %523 = vmatpush1.bf16.msra.mxu0 0
    %524 = vmatprep.subr.bf16.mxu0 0
    %525 = vmatpush1.bf16.msra.mxu0 0
    %526 = vmatprep.subr.bf16.mxu0 0
    %527 = vmatpush1.bf16.msra.mxu0 0
    %528 = vmatprep.mubr.bf16.mxu0 0
    %529 = vmatmul.mubr.bf16.gmra.mrb[0].mxu0 %v445
    %v530 = vpop.f32.mrb[0].mxu0
    %v531 = vadd.f32 0.0, %v530
    %v532 = vpop.f32.mrb[0].mxu0
    %v533 = vpop.f32.mrb[0].mxu0
    %v534 = vadd.f32 0.0, %v533
    %v535 = vpop.f32.mrb[0].mxu0
    %536 = vmatprep.mubr.bf16.mxu0 0
    %537 = vmatmul.mubr.bf16.gmra.mrb[0].mxu0 %v446
    %v538 = vpop.f32.mrb[0].mxu0
    %v539 = vadd.f32 0.0, %v538
    %v540 = vpop.f32.mrb[0].mxu0
    %v541 = vpop.f32.mrb[0].mxu0
    %v542 = vadd.f32 0.0, %v541
    %v543 = vpop.f32.mrb[0].mxu0
    %544 = vmatprep.mubr.bf16.mxu0 0
    %545 = vmatmul.mubr.bf16.gmra.mrb[0].mxu0 %v447
    %v546 = vpop.f32.mrb[0].mxu0
    %v547 = vadd.f32 0.0, %v546
    %v548 = vpop.f32.mrb[0].mxu0
    %v549 = vpop.f32.mrb[0].mxu0
    %v550 = vadd.f32 0.0, %v549
    %v551 = vpop.f32.mrb[0].mxu0
    %552 = vdwg.mxu0
    %v569 = vunpack.c.l.b16 %v410
    %v570 = vunpack.c.l.b16 %v411
    %v571 = vunpack.c.l.b16 %v412
    %v572 = vunpack.c.l.b16 %v413
    %v573 = vunpack.c.l.b16 %v414
    %v574 = vunpack.c.l.b16 %v415
    %v575 = vunpack.c.l.b16 %v416
    %v576 = vunpack.c.l.b16 %v417
    %v577 = vunpack.c.l.b16 %v418
    %v578 = vunpack.c.l.b16 %v419
    %v579 = vunpack.c.l.b16 %v420
    %v580 = vunpack.c.l.b16 %v421
    %v581 = vunpack.c.l.b16 %v422
    %v582 = vunpack.c.l.b16 %v423
    %v583 = vunpack.c.l.b16 %v424
    %v584 = vunpack.c.l.b16 %v425
    %v585 = vpack.c.b16 %v570, %v569
    %v586 = vpack.c.b16 %v572, %v571
    %v587 = vpack.c.b16 %v574, %v573
    %v588 = vpack.c.b16 %v576, %v575
    %v589 = vpack.c.b16 %v578, %v577
    %v590 = vpack.c.b16 %v580, %v579
    %v591 = vpack.c.b16 %v582, %v581
    %v592 = vpack.c.b16 %v584, %v583
    %601 = vmatprep.subr.bf16.mxu0 0
    %602 = vmatpush1.bf16.msra.mxu0 %v585
    %603 = vmatprep.subr.bf16.mxu0 0
    %604 = vmatpush1.bf16.msra.mxu0 %v586
    %605 = vmatprep.subr.bf16.mxu0 0
    %606 = vmatpush1.bf16.msra.mxu0 %v587
    %607 = vmatprep.subr.bf16.mxu0 0
    %608 = vmatpush1.bf16.msra.mxu0 %v588
    %609 = vmatprep.subr.bf16.mxu0 0
    %610 = vmatpush1.bf16.msra.mxu0 %v589
    %611 = vmatprep.subr.bf16.mxu0 0
    %612 = vmatpush1.bf16.msra.mxu0 %v590
    %613 = vmatprep.subr.bf16.mxu0 0
    %614 = vmatpush1.bf16.msra.mxu0 %v591
    %615 = vmatprep.subr.bf16.mxu0 0
    %616 = vmatpush1.bf16.msra.mxu0 %v592
    %617 = vmatprep.subr.bf16.mxu0 0
    %618 = vmatpush1.bf16.msra.mxu0 0
    %619 = vmatprep.subr.bf16.mxu0 0
    %620 = vmatpush1.bf16.msra.mxu0 0
    %621 = vmatprep.subr.bf16.mxu0 0
    %622 = vmatpush1.bf16.msra.mxu0 0
    %623 = vmatprep.subr.bf16.mxu0 0
    %624 = vmatpush1.bf16.msra.mxu0 0
    %625 = vmatprep.subr.bf16.mxu0 0
    %626 = vmatpush1.bf16.msra.mxu0 0
    %627 = vmatprep.subr.bf16.mxu0 0
    %628 = vmatpush1.bf16.msra.mxu0 0
    %629 = vmatprep.subr.bf16.mxu0 0
    %630 = vmatpush1.bf16.msra.mxu0 0
    %631 = vmatprep.subr.bf16.mxu0 0
    %632 = vmatpush1.bf16.msra.mxu0 0
    %633 = vmatprep.mubr.bf16.mxu0 0
    %634 = vmatmul.mubr.bf16.gmra.mrb[0].mxu0 %v426
    %v635 = vpop.f32.mrb[0].mxu0
    %v636 = vadd.f32 %v531, %v635
    %v637 = vpop.f32.mrb[0].mxu0
    %v638 = vpop.f32.mrb[0].mxu0
    %v639 = vadd.f32 %v534, %v638
    %v640 = vpop.f32.mrb[0].mxu0
    %641 = vmatprep.mubr.bf16.mxu0 0
    %642 = vmatmul.mubr.bf16.gmra.mrb[0].mxu0 %v427
    %v643 = vpop.f32.mrb[0].mxu0
    %v644 = vadd.f32 %v539, %v643
    %v645 = vpop.f32.mrb[0].mxu0
    %v646 = vpop.f32.mrb[0].mxu0
    %v647 = vadd.f32 %v542, %v646
    %v648 = vpop.f32.mrb[0].mxu0
    %649 = vmatprep.mubr.bf16.mxu0 0
    %650 = vmatmul.mubr.bf16.gmra.mrb[0].mxu0 %v428
    %v651 = vpop.f32.mrb[0].mxu0
    %v652 = vadd.f32 %v547, %v651
    %v653 = vpop.f32.mrb[0].mxu0
    %v654 = vpop.f32.mrb[0].mxu0
    %v655 = vadd.f32 %v550, %v654
    %v656 = vpop.f32.mrb[0].mxu0
    %657 = vdwg.mxu0
    %v658 = vld [vmem:[#allocation10] sm:$0xf]
    %v659 = vld [vmem:[#allocation10 + $0x4] sm:$0xf]
    %v660 = vld [vmem:[#allocation10 + $0x8] sm:$0xf]
    %v661 = vld [vmem:[#allocation10 + $0xc] sm:$0xf]
    %v662 = vld [vmem:[#allocation10 + $0x10] sm:$0xf]
    %v663 = vld [vmem:[#allocation10 + $0x14] sm:$0xf]
    %v664 = vld [vmem:[#allocation10 + $0x18] sm:$0xf]
    %v665 = vld [vmem:[#allocation10 + $0x1c] sm:$0xf]
    %v666 = vld [vmem:[#allocation10 + $0x20] sm:$0xf]
    %v667 = vld [vmem:[#allocation10 + $0x24] sm:$0xf]
    %v668 = vld [vmem:[#allocation10 + $0x28] sm:$0xf]
    %v669 = vld [vmem:[#allocation10 + $0x2c] sm:$0xf]
    %v670 = vld [vmem:[#allocation10 + $0x30] sm:$0xf]
    %v671 = vld [vmem:[#allocation10 + $0x34] sm:$0xf]
    %v672 = vld [vmem:[#allocation10 + $0x38] sm:$0xf]
    %v673 = vld [vmem:[#allocation10 + $0x3c] sm:$0xf]
    %v674 = vpack.c.bf16 %v385, %v382
    %v675 = vpack.c.bf16 %v393, %v390
    %v676 = vpack.c.bf16 %v401, %v398
    %v693 = vunpack.c.l.b16 %v658
    %v694 = vunpack.c.l.b16 %v659
    %v695 = vunpack.c.l.b16 %v660
    %v696 = vunpack.c.l.b16 %v661
    %v697 = vunpack.c.l.b16 %v662
    %v698 = vunpack.c.l.b16 %v663
    %v699 = vunpack.c.l.b16 %v664
    %v700 = vunpack.c.l.b16 %v665
    %v701 = vunpack.c.l.b16 %v666
    %v702 = vunpack.c.l.b16 %v667
    %v703 = vunpack.c.l.b16 %v668
    %v704 = vunpack.c.l.b16 %v669
    %v705 = vunpack.c.l.b16 %v670
    %v706 = vunpack.c.l.b16 %v671
    %v707 = vunpack.c.l.b16 %v672
    %v708 = vunpack.c.l.b16 %v673
    %v709 = vpack.c.b16 %v694, %v693
    %v710 = vpack.c.b16 %v696, %v695
    %v711 = vpack.c.b16 %v698, %v697
    %v712 = vpack.c.b16 %v700, %v699
    %v713 = vpack.c.b16 %v702, %v701
    %v714 = vpack.c.b16 %v704, %v703
    %v715 = vpack.c.b16 %v706, %v705
    %v716 = vpack.c.b16 %v708, %v707
    %725 = vmatprep.subr.bf16.mxu0 0
    %726 = vmatpush1.bf16.msra.mxu0 %v709
    %727 = vmatprep.subr.bf16.mxu0 0
    %728 = vmatpush1.bf16.msra.mxu0 %v710
    %729 = vmatprep.subr.bf16.mxu0 0
    %730 = vmatpush1.bf16.msra.mxu0 %v711
    %731 = vmatprep.subr.bf16.mxu0 0
    %732 = vmatpush1.bf16.msra.mxu0 %v712
    %733 = vmatprep.subr.bf16.mxu0 0
    %734 = vmatpush1.bf16.msra.mxu0 %v713
    %735 = vmatprep.subr.bf16.mxu0 0
    %736 = vmatpush1.bf16.msra.mxu0 %v714
    %737 = vmatprep.subr.bf16.mxu0 0
    %738 = vmatpush1.bf16.msra.mxu0 %v715
    %739 = vmatprep.subr.bf16.mxu0 0
    %740 = vmatpush1.bf16.msra.mxu0 %v716
    %741 = vmatprep.subr.bf16.mxu0 0
    %742 = vmatpush1.bf16.msra.mxu0 0
    %743 = vmatprep.subr.bf16.mxu0 0
    %744 = vmatpush1.bf16.msra.mxu0 0
    %745 = vmatprep.subr.bf16.mxu0 0
    %746 = vmatpush1.bf16.msra.mxu0 0
    %747 = vmatprep.subr.bf16.mxu0 0
    %748 = vmatpush1.bf16.msra.mxu0 0
    %749 = vmatprep.subr.bf16.mxu0 0
    %750 = vmatpush1.bf16.msra.mxu0 0
    %751 = vmatprep.subr.bf16.mxu0 0
    %752 = vmatpush1.bf16.msra.mxu0 0
    %753 = vmatprep.subr.bf16.mxu0 0
    %754 = vmatpush1.bf16.msra.mxu0 0
    %755 = vmatprep.subr.bf16.mxu0 0
    %756 = vmatpush1.bf16.msra.mxu0 0
    %757 = vmatprep.mubr.bf16.mxu0 0
    %758 = vmatmul.mubr.bf16.gmra.mrb[0].mxu0 %v674
    %v759 = vpop.f32.mrb[0].mxu0
    %v760 = vadd.f32 0.0, %v759
    %v761 = vpop.f32.mrb[0].mxu0
    %v762 = vpop.f32.mrb[0].mxu0
    %v763 = vadd.f32 0.0, %v762
    %v764 = vpop.f32.mrb[0].mxu0
    %765 = vmatprep.mubr.bf16.mxu0 0
    %766 = vmatmul.mubr.bf16.gmra.mrb[0].mxu0 %v675
    %v767 = vpop.f32.mrb[0].mxu0
    %v768 = vadd.f32 0.0, %v767
    %v769 = vpop.f32.mrb[0].mxu0
    %v770 = vpop.f32.mrb[0].mxu0
    %v771 = vadd.f32 0.0, %v770
    %v772 = vpop.f32.mrb[0].mxu0
    %773 = vmatprep.mubr.bf16.mxu0 0
    %774 = vmatmul.mubr.bf16.gmra.mrb[0].mxu0 %v676
    %v775 = vpop.f32.mrb[0].mxu0
    %v776 = vadd.f32 0.0, %v775
    %v777 = vpop.f32.mrb[0].mxu0
    %v778 = vpop.f32.mrb[0].mxu0
    %v779 = vadd.f32 0.0, %v778
    %v780 = vpop.f32.mrb[0].mxu0
    %781 = vdwg.mxu0
    %v782 = vadd.f32 %v636, %v760
    %v783 = vadd.f32 %v639, %v763
    %v784 = vadd.f32 %v644, %v768
    %v785 = vadd.f32 %v647, %v771
    %v786 = vadd.f32 %v652, %v776
    %v787 = vadd.f32 %v655, %v779
    %v788 = vld [vmem:[#allocation11] sm:$0x1]
    %v789 = vld [vmem:[%s9] sm:$0x1]
    %v790 = vadd.f32 %v782, %v783
    %v791 = vadd.f32 %v790, %v784
    %v792 = vadd.f32 %v791, %v785
    %v793 = vadd.f32 %v792, %v786
    %v794 = vadd.f32 %v793, %v787
    %v795 = vrot.slane %v794, 4
    %v796 = vadd.f32 %v794, %v795
    %v797 = vrot.slane %v796, 2
    %v798 = vadd.f32 %v796, %v797
    %v799 = vrot.slane %v798, 1
    %v800 = vadd.f32 %v798, %v799
    %v801 = vmul.f32 %v782, %v782
    %v802 = vmul.f32 %v783, %v783
    %v803 = vmul.f32 %v784, %v784
    %v804 = vmul.f32 %v785, %v785
    %v805 = vmul.f32 %v786, %v786
    %v806 = vmul.f32 %v787, %v787
    %v807 = vadd.f32 %v801, %v802
    %v808 = vadd.f32 %v807, %v803
    %v809 = vadd.f32 %v808, %v804
    %v810 = vadd.f32 %v809, %v805
    %v811 = vadd.f32 %v810, %v806
    %v812 = vrot.slane %v811, 4
    %v813 = vadd.f32 %v811, %v812
    %v814 = vrot.slane %v813, 2
    %v815 = vadd.f32 %v813, %v814
    %v816 = vrot.slane %v815, 1
    %v817 = vadd.f32 %v815, %v816
    %v818 = vmul.f32 %v800, 0.020833334
    %v819 = vmul.f32 %v817, 0.020833334
    %v820 = vmul.f32 %v818, %v818
    %v821 = vsub.f32 %v819, %v820
    %v822 = vmax.f32 %v821, 0.0
    %v823 = vsub.f32 %v782, %v818
    %v824 = vsub.f32 %v783, %v818
    %v825 = vsub.f32 %v784, %v818
    %v826 = vsub.f32 %v785, %v818
    %v827 = vsub.f32 %v786, %v818
    %v828 = vsub.f32 %v787, %v818
    %v829 = vadd.f32 %v822, 1e-05
    %v830 = vrsqrt.pop %v829
    %v831 = vmul.f32 %v823, %v830
    %v832 = vmul.f32 %v824, %v830
    %v833 = vmul.f32 %v825, %v830
    %v834 = vmul.f32 %v826, %v830
    %v835 = vmul.f32 %v827, %v830
    %v836 = vmul.f32 %v828, %v830
    %v838 = vlaneseq
    %v839 = vshrl.u32 %v838, 7
    %v840 = vsub.s32 0, %v839
    %v841 = vrot.slane %v788, %v840
    %v843 = vmul.f32 %v831, %v841
    %v844 = vmul.f32 %v832, %v841
    %v845 = vmul.f32 %v833, %v841
    %v846 = vmul.f32 %v834, %v841
    %v847 = vmul.f32 %v835, %v841
    %v848 = vmul.f32 %v836, %v841
    %v850 = vlaneseq
    %v851 = vshrl.u32 %v850, 7
    %v852 = vsub.s32 0, %v851
    %v853 = vrot.slane %v789, %v852
    %v855 = vadd.f32 %v843, %v853
    %v856 = vadd.f32 %v844, %v853
    %v857 = vadd.f32 %v845, %v853
    %v858 = vadd.f32 %v846, %v853
    %v859 = vadd.f32 %v847, %v853
    %v860 = vadd.f32 %v848, %v853
    %v861 = vmax.f32 %v855, 0.0
    %v862 = vmax.f32 %v856, 0.0
    %v863 = vmax.f32 %v857, 0.0
    %v864 = vmax.f32 %v858, 0.0
    %v865 = vmax.f32 %v859, 0.0
    %v866 = vmax.f32 %v860, 0.0
    %v867 = vld [vmem:[%s10] sm:$0xf]
    %v868 = vld [vmem:[%s10 + $0x4] sm:$0xf]
    %v869 = vld [vmem:[%s10 + $0x8] sm:$0xf]
    %v870 = vld [vmem:[%s10 + $0xc] sm:$0xf]
    %v871 = vld [vmem:[%s10 + $0x10] sm:$0xf]
    %v872 = vld [vmem:[%s10 + $0x14] sm:$0xf]
    %v873 = vld [vmem:[%s10 + $0x18] sm:$0xf]
    %v874 = vld [vmem:[%s10 + $0x1c] sm:$0xf]
    %v875 = vld [vmem:[%s10 + $0x20] sm:$0xf]
    %v876 = vld [vmem:[%s10 + $0x24] sm:$0xf]
    %v877 = vld [vmem:[%s10 + $0x28] sm:$0xf]
    %v878 = vld [vmem:[%s10 + $0x2c] sm:$0xf]
    %v879 = vld [vmem:[%s10 + $0x30] sm:$0xf]
    %v880 = vld [vmem:[%s10 + $0x34] sm:$0xf]
    %v881 = vld [vmem:[%s10 + $0x38] sm:$0xf]
    %v882 = vld [vmem:[%s10 + $0x3c] sm:$0xf]
    %v883 = vpack.c.bf16 %v862, %v861
    %v884 = vpack.c.bf16 %v864, %v863
    %v885 = vpack.c.bf16 %v866, %v865
    %v902 = vunpack.c.l.b16 %v867
    %v903 = vunpack.c.l.b16 %v868
    %v904 = vunpack.c.l.b16 %v869
    %v905 = vunpack.c.l.b16 %v870
    %v906 = vunpack.c.l.b16 %v871
    %v907 = vunpack.c.l.b16 %v872
    %v908 = vunpack.c.l.b16 %v873
    %v909 = vunpack.c.l.b16 %v874
    %v910 = vunpack.c.l.b16 %v875
    %v911 = vunpack.c.l.b16 %v876
    %v912 = vunpack.c.l.b16 %v877
    %v913 = vunpack.c.l.b16 %v878
    %v914 = vunpack.c.l.b16 %v879
    %v915 = vunpack.c.l.b16 %v880
    %v916 = vunpack.c.l.b16 %v881
    %v917 = vunpack.c.l.b16 %v882
    %v918 = vpack.c.b16 %v903, %v902
    %v919 = vpack.c.b16 %v905, %v904
    %v920 = vpack.c.b16 %v907, %v906
    %v921 = vpack.c.b16 %v909, %v908
    %v922 = vpack.c.b16 %v911, %v910
    %v923 = vpack.c.b16 %v913, %v912
    %v924 = vpack.c.b16 %v915, %v914
    %v925 = vpack.c.b16 %v917, %v916
    %934 = vmatprep.subr.bf16.mxu0 0
    %935 = vmatpush1.bf16.msra.mxu0 %v918
    %936 = vmatprep.subr.bf16.mxu0 0
    %937 = vmatpush1.bf16.msra.mxu0 %v919
    %938 = vmatprep.subr.bf16.mxu0 0
    %939 = vmatpush1.bf16.msra.mxu0 %v920
    %940 = vmatprep.subr.bf16.mxu0 0
    %941 = vmatpush1.bf16.msra.mxu0 %v921
    %942 = vmatprep.subr.bf16.mxu0 0
    %943 = vmatpush1.bf16.msra.mxu0 %v922
    %944 = vmatprep.subr.bf16.mxu0 0
    %945 = vmatpush1.bf16.msra.mxu0 %v923
    %946 = vmatprep.subr.bf16.mxu0 0
    %947 = vmatpush1.bf16.msra.mxu0 %v924
    %948 = vmatprep.subr.bf16.mxu0 0
    %949 = vmatpush1.bf16.msra.mxu0 %v925
    %950 = vmatprep.subr.bf16.mxu0 0
    %951 = vmatpush1.bf16.msra.mxu0 0
    %952 = vmatprep.subr.bf16.mxu0 0
    %953 = vmatpush1.bf16.msra.mxu0 0
    %954 = vmatprep.subr.bf16.mxu0 0
    %955 = vmatpush1.bf16.msra.mxu0 0
    %956 = vmatprep.subr.bf16.mxu0 0
    %957 = vmatpush1.bf16.msra.mxu0 0
    %958 = vmatprep.subr.bf16.mxu0 0
    %959 = vmatpush1.bf16.msra.mxu0 0
    %960 = vmatprep.subr.bf16.mxu0 0
    %961 = vmatpush1.bf16.msra.mxu0 0
    %962 = vmatprep.subr.bf16.mxu0 0
    %963 = vmatpush1.bf16.msra.mxu0 0
    %964 = vmatprep.subr.bf16.mxu0 0
    %965 = vmatpush1.bf16.msra.mxu0 0
    %966 = vmatprep.mubr.bf16.mxu0 0
    %967 = vmatmul.mubr.bf16.gmra.mrb[0].mxu0 %v883
    %v968 = vpop.f32.mrb[0].mxu0
    %v969 = vadd.f32 0.0, %v968
    %v970 = vpop.f32.mrb[0].mxu0
    %v971 = vpop.f32.mrb[0].mxu0
    %v972 = vadd.f32 0.0, %v971
    %v973 = vpop.f32.mrb[0].mxu0
    %974 = vmatprep.mubr.bf16.mxu0 0
    %975 = vmatmul.mubr.bf16.gmra.mrb[0].mxu0 %v884
    %v976 = vpop.f32.mrb[0].mxu0
    %v977 = vadd.f32 0.0, %v976
    %v978 = vpop.f32.mrb[0].mxu0
    %v979 = vpop.f32.mrb[0].mxu0
    %v980 = vadd.f32 0.0, %v979
    %v981 = vpop.f32.mrb[0].mxu0
    %982 = vmatprep.mubr.bf16.mxu0 0
    %983 = vmatmul.mubr.bf16.gmra.mrb[0].mxu0 %v885
    %v984 = vpop.f32.mrb[0].mxu0
    %v985 = vadd.f32 0.0, %v984
    %v986 = vpop.f32.mrb[0].mxu0
    %v987 = vpop.f32.mrb[0].mxu0
    %v988 = vadd.f32 0.0, %v987
    %v989 = vpop.f32.mrb[0].mxu0
    %990 = vdwg.mxu0
    %v991 = vld [vmem:[%s11] sm:$0x1]
    %v992 = vld [vmem:[%s12] sm:$0x1]
    %v993 = vadd.f32 %v969, %v972
    %v994 = vadd.f32 %v993, %v977
    %v995 = vadd.f32 %v994, %v980
    %v996 = vadd.f32 %v995, %v985
    %v997 = vadd.f32 %v996, %v988
    %v998 = vrot.slane %v997, 4
    %v999 = vadd.f32 %v997, %v998
    %v1000 = vrot.slane %v999, 2
    %v1001 = vadd.f32 %v999, %v1000
    %v1002 = vrot.slane %v1001, 1
    %v1003 = vadd.f32 %v1001, %v1002
    %v1004 = vmul.f32 %v969, %v969
    %v1005 = vmul.f32 %v972, %v972
    %v1006 = vmul.f32 %v977, %v977
    %v1007 = vmul.f32 %v980, %v980
    %v1008 = vmul.f32 %v985, %v985
    %v1009 = vmul.f32 %v988, %v988
    %v1010 = vadd.f32 %v1004, %v1005
    %v1011 = vadd.f32 %v1010, %v1006
    %v1012 = vadd.f32 %v1011, %v1007
    %v1013 = vadd.f32 %v1012, %v1008
    %v1014 = vadd.f32 %v1013, %v1009
    %v1015 = vrot.slane %v1014, 4
    %v1016 = vadd.f32 %v1014, %v1015
    %v1017 = vrot.slane %v1016, 2
    %v1018 = vadd.f32 %v1016, %v1017
    %v1019 = vrot.slane %v1018, 1
    %v1020 = vadd.f32 %v1018, %v1019
    %v1021 = vmul.f32 %v1003, 0.020833334
    %v1022 = vmul.f32 %v1020, 0.020833334
    %v1023 = vmul.f32 %v1021, %v1021
    %v1024 = vsub.f32 %v1022, %v1023
    %v1025 = vmax.f32 %v1024, 0.0
    %v1026 = vsub.f32 %v969, %v1021
    %v1027 = vsub.f32 %v972, %v1021
    %v1028 = vsub.f32 %v977, %v1021
    %v1029 = vsub.f32 %v980, %v1021
    %v1030 = vsub.f32 %v985, %v1021
    %v1031 = vsub.f32 %v988, %v1021
    %v1032 = vadd.f32 %v1025, 1e-05
    %v1033 = vrsqrt.pop %v1032
    %v1034 = vmul.f32 %v1026, %v1033
    %v1035 = vmul.f32 %v1027, %v1033
    %v1036 = vmul.f32 %v1028, %v1033
    %v1037 = vmul.f32 %v1029, %v1033
    %v1038 = vmul.f32 %v1030, %v1033
    %v1039 = vmul.f32 %v1031, %v1033
    %v1041 = vlaneseq
    %v1042 = vshrl.u32 %v1041, 7
    %v1043 = vsub.s32 0, %v1042
    %v1044 = vrot.slane %v991, %v1043
    %v1046 = vmul.f32 %v1034, %v1044
    %v1047 = vmul.f32 %v1035, %v1044
    %v1048 = vmul.f32 %v1036, %v1044
    %v1049 = vmul.f32 %v1037, %v1044
    %v1050 = vmul.f32 %v1038, %v1044
    %v1051 = vmul.f32 %v1039, %v1044
    %v1053 = vlaneseq
    %v1054 = vshrl.u32 %v1053, 7
    %v1055 = vsub.s32 0, %v1054
    %v1056 = vrot.slane %v992, %v1055
    %v1058 = vadd.f32 %v1046, %v1056
    %v1059 = vadd.f32 %v1047, %v1056
    %v1060 = vadd.f32 %v1048, %v1056
    %v1061 = vadd.f32 %v1049, %v1056
    %v1062 = vadd.f32 %v1050, %v1056
    %v1063 = vadd.f32 %v1051, %v1056
    %v1064 = vmax.f32 %v1058, 0.0
    %v1065 = vmax.f32 %v1059, 0.0
    %v1066 = vmax.f32 %v1060, 0.0
    %v1067 = vmax.f32 %v1061, 0.0
    %v1068 = vmax.f32 %v1062, 0.0
    %v1069 = vmax.f32 %v1063, 0.0
    %1070 = vst [vmem:[#allocation18] sm:$0xff] %v1064
    %1071 = vst [vmem:[#allocation18 + $0x8] sm:$0xff] %v1065
    %1072 = vst [vmem:[#allocation18 + $0x10] sm:$0xff] %v1066
    %1073 = vst [vmem:[#allocation18 + $0x18] sm:$0xff] %v1067
    %1074 = vst [vmem:[#allocation18 + $0x20] sm:$0xff] %v1068
    %1075 = vst [vmem:[#allocation18 + $0x28] sm:$0xff] %v1069
    %v1076 = vlaneseq
    %v1077 = vshrl.u32 %v1076, 7
    %v1078 = vadd.s32 %v1077, 8
    %v1079 = vld [vmem:[#allocation2] sm:$0x1]
    %v1080 = vlaneseq
    %v1081 = vshrl.u32 %v1080, 7
    %v1082 = vsub.s32 0, %v1081
    %v1083 = vrot.slane %v1079, %v1082
    %vm1084 = vcmp.eq.s32.totalorder %v1077, %v1083
    %vm1085 = vcmp.eq.s32.totalorder %v1078, %v1083
    %v1086 = vsel %vm1084, 1.0, 0.0
    %v1087 = vsel %vm1085, 1.0, 0.0
    %v1088 = vpack.c.bf16 %v1087, %v1086
    %v1089 = vpack.c.bf16 %v1065, %v1064
    %v1090 = vpack.c.bf16 %v1067, %v1066
    %v1091 = vpack.c.bf16 %v1069, %v1068
    %vm1092 = vcmask 392192
    %v1094 = vsel %vm1092, %v1088, 0
    %1096 = vmatprep.subr.bf16.mxu0 0
    %1097 = vmatpush1.bf16.msra.mxu0 %v1089
    %1098 = vmatprep.subr.bf16.mxu0 0
    %1099 = vmatpush1.bf16.msra.mxu0 %v1090
    %1100 = vmatprep.subr.bf16.mxu0 0
    %1101 = vmatpush1.bf16.msra.mxu0 %v1091
    %1102 = vmatprep.subr.bf16.mxu0 0
    %1103 = vmatpush1.bf16.msra.mxu0 0
    %1104 = vmatprep.subr.bf16.mxu0 0
    %1105 = vmatpush1.bf16.msra.mxu0 0
    %1106 = vmatprep.subr.bf16.mxu0 0
    %1107 = vmatpush1.bf16.msra.mxu0 0
    %1108 = vmatprep.subr.bf16.mxu0 0
    %1109 = vmatpush1.bf16.msra.mxu0 0
    %1110 = vmatprep.subr.bf16.mxu0 0
    %1111 = vmatpush1.bf16.msra.mxu0 0
    %1112 = vmatprep.subr.bf16.mxu0 0
    %1113 = vmatpush1.bf16.msra.mxu0 0
    %1114 = vmatprep.subr.bf16.mxu0 0
    %1115 = vmatpush1.bf16.msra.mxu0 0
    %1116 = vmatprep.subr.bf16.mxu0 0
    %1117 = vmatpush1.bf16.msra.mxu0 0
    %1118 = vmatprep.subr.bf16.mxu0 0
    %1119 = vmatpush1.bf16.msra.mxu0 0
    %1120 = vmatprep.subr.bf16.mxu0 0
    %1121 = vmatpush1.bf16.msra.mxu0 0
    %1122 = vmatprep.subr.bf16.mxu0 0
    %1123 = vmatpush1.bf16.msra.mxu0 0
    %1124 = vmatprep.subr.bf16.mxu0 0
    %1125 = vmatpush1.bf16.msra.mxu0 0
    %1126 = vmatprep.subr.bf16.mxu0 0
    %1127 = vmatpush1.bf16.msra.mxu0 0
    %1128 = vmatprep.mubr.bf16.mxu0 0
    %1129 = vmatmul.mubr.bf16.gmra.mrb[0].mxu0 %v1094
    %v1130 = vpop.f32.mrb[0].mxu0
    %v1131 = vadd.f32 0.0, %v1130
    %v1132 = vpop.f32.mrb[0].mxu0
    %v1133 = vpop.f32.mrb[0].mxu0
    %v1134 = vadd.f32 0.0, %v1133
    %v1135 = vpop.f32.mrb[0].mxu0
    %1136 = vdwg.mxu0
    %v1137 = vld [vmem:[#allocation7] sm:$0xff]
    %v1138 = vld [vmem:[#allocation7 + $0x8] sm:$0xff]
    %v1139 = vld [vmem:[#allocation13] sm:$0xf]
    %v1140 = vld [vmem:[#allocation13 + $0x4] sm:$0xf]
    %v1141 = vld [vmem:[#allocation13 + $0x8] sm:$0xf]
    %v1142 = vld [vmem:[#allocation13 + $0xc] sm:$0xf]
    %v1143 = vld [vmem:[#allocation13 + $0x10] sm:$0xf]
    %v1144 = vld [vmem:[#allocation13 + $0x14] sm:$0xf]
    %v1145 = vld [vmem:[#allocation13 + $0x18] sm:$0xf]
    %v1146 = vld [vmem:[#allocation13 + $0x1c] sm:$0xf]
    %v1147 = vld [vmem:[#allocation13 + $0x20] sm:$0xf]
    %v1148 = vld [vmem:[#allocation13 + $0x24] sm:$0xf]
    %v1149 = vld [vmem:[#allocation13 + $0x28] sm:$0xf]
    %v1150 = vld [vmem:[#allocation13 + $0x2c] sm:$0xf]
    %v1151 = vld [vmem:[#allocation13 + $0x30] sm:$0xf]
    %v1152 = vld [vmem:[#allocation13 + $0x34] sm:$0xf]
    %v1153 = vld [vmem:[#allocation13 + $0x38] sm:$0xf]
    %v1154 = vld [vmem:[#allocation13 + $0x3c] sm:$0xf]
    %v1155 = vpack.c.bf16 %v1138, %v1137
    %v1156 = vld [vmem:[#allocation14] sm:$0xf]
    %v1157 = vld [vmem:[#allocation14 + $0x4] sm:$0xf]
    %v1158 = vld [vmem:[#allocation14 + $0x8] sm:$0xf]
    %v1159 = vld [vmem:[#allocation14 + $0xc] sm:$0xf]
    %v1160 = vld [vmem:[#allocation14 + $0x10] sm:$0xf]
    %v1161 = vld [vmem:[#allocation14 + $0x14] sm:$0xf]
    %v1162 = vld [vmem:[#allocation14 + $0x18] sm:$0xf]
    %v1163 = vld [vmem:[#allocation14 + $0x1c] sm:$0xf]
    %v1164 = vld [vmem:[#allocation14 + $0x20] sm:$0xf]
    %v1165 = vld [vmem:[#allocation14 + $0x24] sm:$0xf]
    %v1166 = vld [vmem:[#allocation14 + $0x28] sm:$0xf]
    %v1167 = vld [vmem:[#allocation14 + $0x2c] sm:$0xf]
    %v1168 = vld [vmem:[#allocation14 + $0x30] sm:$0xf]
    %v1169 = vld [vmem:[#allocation14 + $0x34] sm:$0xf]
    %v1170 = vld [vmem:[#allocation14 + $0x38] sm:$0xf]
    %v1171 = vld [vmem:[#allocation14 + $0x3c] sm:$0xf]
    %v1172 = vpack.c.bf16 %v1134, %v1131
    %v1189 = vunpack.c.l.b16 %v1156
    %v1190 = vunpack.c.l.b16 %v1157
    %v1191 = vunpack.c.l.b16 %v1158
    %v1192 = vunpack.c.l.b16 %v1159
    %v1193 = vunpack.c.l.b16 %v1160
    %v1194 = vunpack.c.l.b16 %v1161
    %v1195 = vunpack.c.l.b16 %v1162
    %v1196 = vunpack.c.l.b16 %v1163
    %v1197 = vunpack.c.l.b16 %v1164
    %v1198 = vunpack.c.l.b16 %v1165
    %v1199 = vunpack.c.l.b16 %v1166
    %v1200 = vunpack.c.l.b16 %v1167
    %v1201 = vunpack.c.l.b16 %v1168
    %v1202 = vunpack.c.l.b16 %v1169
    %v1203 = vunpack.c.l.b16 %v1170
    %v1204 = vunpack.c.l.b16 %v1171
    %v1205 = vpack.c.b16 %v1190, %v1189
    %v1206 = vpack.c.b16 %v1192, %v1191
    %v1207 = vpack.c.b16 %v1194, %v1193
    %v1208 = vpack.c.b16 %v1196, %v1195
    %v1209 = vpack.c.b16 %v1198, %v1197
    %v1210 = vpack.c.b16 %v1200, %v1199
    %v1211 = vpack.c.b16 %v1202, %v1201
    %v1212 = vpack.c.b16 %v1204, %v1203
    %1221 = vmatprep.subr.bf16.mxu0 0
    %1222 = vmatpush1.bf16.msra.mxu0 %v1205
    %1223 = vmatprep.subr.bf16.mxu0 0
    %1224 = vmatpush1.bf16.msra.mxu0 %v1206
    %1225 = vmatprep.subr.bf16.mxu0 0
    %1226 = vmatpush1.bf16.msra.mxu0 %v1207
    %1227 = vmatprep.subr.bf16.mxu0 0
    %1228 = vmatpush1.bf16.msra.mxu0 %v1208
    %1229 = vmatprep.subr.bf16.mxu0 0
    %1230 = vmatpush1.bf16.msra.mxu0 %v1209
    %1231 = vmatprep.subr.bf16.mxu0 0
    %1232 = vmatpush1.bf16.msra.mxu0 %v1210
    %1233 = vmatprep.subr.bf16.mxu0 0
    %1234 = vmatpush1.bf16.msra.mxu0 %v1211
    %1235 = vmatprep.subr.bf16.mxu0 0
    %1236 = vmatpush1.bf16.msra.mxu0 %v1212
    %1237 = vmatprep.subr.bf16.mxu0 0
    %1238 = vmatpush1.bf16.msra.mxu0 0
    %1239 = vmatprep.subr.bf16.mxu0 0
    %1240 = vmatpush1.bf16.msra.mxu0 0
    %1241 = vmatprep.subr.bf16.mxu0 0
    %1242 = vmatpush1.bf16.msra.mxu0 0
    %1243 = vmatprep.subr.bf16.mxu0 0
    %1244 = vmatpush1.bf16.msra.mxu0 0
    %1245 = vmatprep.subr.bf16.mxu0 0
    %1246 = vmatpush1.bf16.msra.mxu0 0
    %1247 = vmatprep.subr.bf16.mxu0 0
    %1248 = vmatpush1.bf16.msra.mxu0 0
    %1249 = vmatprep.subr.bf16.mxu0 0
    %1250 = vmatpush1.bf16.msra.mxu0 0
    %1251 = vmatprep.subr.bf16.mxu0 0
    %1252 = vmatpush1.bf16.msra.mxu0 0
    %1253 = vmatprep.mubr.bf16.mxu0 0
    %1254 = vmatmul.mubr.bf16.gmra.mrb[0].mxu0 %v1172
    %v1255 = vpop.f32.mrb[0].mxu0
    %v1256 = vadd.f32 0.0, %v1255
    %v1257 = vpop.f32.mrb[0].mxu0
    %v1258 = vpop.f32.mrb[0].mxu0
    %v1259 = vadd.f32 0.0, %v1258
    %v1260 = vpop.f32.mrb[0].mxu0
    %1261 = vdwg.mxu0
    %v1278 = vunpack.c.l.b16 %v1139
    %v1279 = vunpack.c.l.b16 %v1140
    %v1280 = vunpack.c.l.b16 %v1141
    %v1281 = vunpack.c.l.b16 %v1142
    %v1282 = vunpack.c.l.b16 %v1143
    %v1283 = vunpack.c.l.b16 %v1144
    %v1284 = vunpack.c.l.b16 %v1145
    %v1285 = vunpack.c.l.b16 %v1146
    %v1286 = vunpack.c.l.b16 %v1147
    %v1287 = vunpack.c.l.b16 %v1148
    %v1288 = vunpack.c.l.b16 %v1149
    %v1289 = vunpack.c.l.b16 %v1150
    %v1290 = vunpack.c.l.b16 %v1151
    %v1291 = vunpack.c.l.b16 %v1152
    %v1292 = vunpack.c.l.b16 %v1153
    %v1293 = vunpack.c.l.b16 %v1154
    %v1294 = vpack.c.b16 %v1279, %v1278
    %v1295 = vpack.c.b16 %v1281, %v1280
    %v1296 = vpack.c.b16 %v1283, %v1282
    %v1297 = vpack.c.b16 %v1285, %v1284
    %v1298 = vpack.c.b16 %v1287, %v1286
    %v1299 = vpack.c.b16 %v1289, %v1288
    %v1300 = vpack.c.b16 %v1291, %v1290
    %v1301 = vpack.c.b16 %v1293, %v1292
    %1310 = vmatprep.subr.bf16.mxu0 0
    %1311 = vmatpush1.bf16.msra.mxu0 %v1294
    %1312 = vmatprep.subr.bf16.mxu0 0
    %1313 = vmatpush1.bf16.msra.mxu0 %v1295
    %1314 = vmatprep.subr.bf16.mxu0 0
    %1315 = vmatpush1.bf16.msra.mxu0 %v1296
    %1316 = vmatprep.subr.bf16.mxu0 0
    %1317 = vmatpush1.bf16.msra.mxu0 %v1297
    %1318 = vmatprep.subr.bf16.mxu0 0
    %1319 = vmatpush1.bf16.msra.mxu0 %v1298
    %1320 = vmatprep.subr.bf16.mxu0 0
    %1321 = vmatpush1.bf16.msra.mxu0 %v1299
    %1322 = vmatprep.subr.bf16.mxu0 0
    %1323 = vmatpush1.bf16.msra.mxu0 %v1300
    %1324 = vmatprep.subr.bf16.mxu0 0
    %1325 = vmatpush1.bf16.msra.mxu0 %v1301
    %1326 = vmatprep.subr.bf16.mxu0 0
    %1327 = vmatpush1.bf16.msra.mxu0 0
    %1328 = vmatprep.subr.bf16.mxu0 0
    %1329 = vmatpush1.bf16.msra.mxu0 0
    %1330 = vmatprep.subr.bf16.mxu0 0
    %1331 = vmatpush1.bf16.msra.mxu0 0
    %1332 = vmatprep.subr.bf16.mxu0 0
    %1333 = vmatpush1.bf16.msra.mxu0 0
    %1334 = vmatprep.subr.bf16.mxu0 0
    %1335 = vmatpush1.bf16.msra.mxu0 0
    %1336 = vmatprep.subr.bf16.mxu0 0
    %1337 = vmatpush1.bf16.msra.mxu0 0
    %1338 = vmatprep.subr.bf16.mxu0 0
    %1339 = vmatpush1.bf16.msra.mxu0 0
    %1340 = vmatprep.subr.bf16.mxu0 0
    %1341 = vmatpush1.bf16.msra.mxu0 0
    %1342 = vmatprep.mubr.bf16.mxu0 0
    %1343 = vmatmul.mubr.bf16.gmra.mrb[0].mxu0 %v1155
    %v1344 = vpop.f32.mrb[0].mxu0
    %v1345 = vadd.f32 %v1256, %v1344
    %v1346 = vpop.f32.mrb[0].mxu0
    %v1347 = vpop.f32.mrb[0].mxu0
    %v1348 = vadd.f32 %v1259, %v1347
    %v1349 = vpop.f32.mrb[0].mxu0
    %1350 = vdwg.mxu0
    %v1351 = vld [vmem:[%s15] sm:$0x1]
    %v1352 = vld [vmem:[%s16] sm:$0x1]
    %v1353 = vadd.f32 %v1345, %v1348
    %v1354 = vrot.slane %v1353, 4
    %v1355 = vadd.f32 %v1353, %v1354
    %v1356 = vrot.slane %v1355, 2
    %v1357 = vadd.f32 %v1355, %v1356
    %v1358 = vrot.slane %v1357, 1
    %v1359 = vadd.f32 %v1357, %v1358
    %v1360 = vmul.f32 %v1345, %v1345
    %v1361 = vmul.f32 %v1348, %v1348
    %v1362 = vadd.f32 %v1360, %v1361
    %v1363 = vrot.slane %v1362, 4
    %v1364 = vadd.f32 %v1362, %v1363
    %v1365 = vrot.slane %v1364, 2
    %v1366 = vadd.f32 %v1364, %v1365
    %v1367 = vrot.slane %v1366, 1
    %v1368 = vadd.f32 %v1366, %v1367
    %v1369 = vmul.f32 %v1359, 0.0625
    %v1370 = vmul.f32 %v1368, 0.0625
    %v1371 = vmul.f32 %v1369, %v1369
    %v1372 = vsub.f32 %v1370, %v1371
    %v1373 = vmax.f32 %v1372, 0.0
    %v1374 = vsub.f32 %v1345, %v1369
    %v1375 = vsub.f32 %v1348, %v1369
    %v1376 = vadd.f32 %v1373, 1e-05
    %v1377 = vrsqrt.pop %v1376
    %v1378 = vmul.f32 %v1374, %v1377
    %v1379 = vmul.f32 %v1375, %v1377
    %v1381 = vlaneseq
    %v1382 = vshrl.u32 %v1381, 7
    %v1383 = vsub.s32 0, %v1382
    %v1384 = vrot.slane %v1351, %v1383
    %v1386 = vmul.f32 %v1378, %v1384
    %v1387 = vmul.f32 %v1379, %v1384
    %v1389 = vlaneseq
    %v1390 = vshrl.u32 %v1389, 7
    %v1391 = vsub.s32 0, %v1390
    %v1392 = vrot.slane %v1352, %v1391
    %v1394 = vadd.f32 %v1386, %v1392
    %v1395 = vadd.f32 %v1387, %v1392
    %v1396 = vmax.f32 %v1394, 0.0
    %v1397 = vmax.f32 %v1395, 0.0
    %v1398 = vld [vmem:[#allocation16] sm:$0xf]
    %v1399 = vld [vmem:[#allocation16 + $0x4] sm:$0xf]
    %v1400 = vld [vmem:[#allocation16 + $0x8] sm:$0xf]
    %v1401 = vld [vmem:[#allocation16 + $0xc] sm:$0xf]
    %v1402 = vld [vmem:[#allocation16 + $0x10] sm:$0xf]
    %v1403 = vld [vmem:[#allocation16 + $0x14] sm:$0xf]
    %v1404 = vld [vmem:[#allocation16 + $0x18] sm:$0xf]
    %v1405 = vld [vmem:[#allocation16 + $0x1c] sm:$0xf]
    %v1406 = vld [vmem:[#allocation16 + $0x20] sm:$0xf]
    %v1407 = vld [vmem:[#allocation16 + $0x24] sm:$0xf]
    %v1408 = vld [vmem:[#allocation16 + $0x28] sm:$0xf]
    %v1409 = vld [vmem:[#allocation16 + $0x2c] sm:$0xf]
    %v1410 = vld [vmem:[#allocation16 + $0x30] sm:$0xf]
    %v1411 = vld [vmem:[#allocation16 + $0x34] sm:$0xf]
    %v1412 = vld [vmem:[#allocation16 + $0x38] sm:$0xf]
    %v1413 = vld [vmem:[#allocation16 + $0x3c] sm:$0xf]
    %v1414 = vpack.c.bf16 %v1397, %v1396
    %v1431 = vunpack.c.l.b16 %v1398
    %v1432 = vunpack.c.l.b16 %v1399
    %v1433 = vunpack.c.l.b16 %v1400
    %v1434 = vunpack.c.l.b16 %v1401
    %v1435 = vunpack.c.l.b16 %v1402
    %v1436 = vunpack.c.l.b16 %v1403
    %v1437 = vunpack.c.l.b16 %v1404
    %v1438 = vunpack.c.l.b16 %v1405
    %v1439 = vunpack.c.l.b16 %v1406
    %v1440 = vunpack.c.l.b16 %v1407
    %v1441 = vunpack.c.l.b16 %v1408
    %v1442 = vunpack.c.l.b16 %v1409
    %v1443 = vunpack.c.l.b16 %v1410
    %v1444 = vunpack.c.l.b16 %v1411
    %v1445 = vunpack.c.l.b16 %v1412
    %v1446 = vunpack.c.l.b16 %v1413
    %v1447 = vpack.c.b16 %v1432, %v1431
    %v1448 = vpack.c.b16 %v1434, %v1433
    %v1449 = vpack.c.b16 %v1436, %v1435
    %v1450 = vpack.c.b16 %v1438, %v1437
    %v1451 = vpack.c.b16 %v1440, %v1439
    %v1452 = vpack.c.b16 %v1442, %v1441
    %v1453 = vpack.c.b16 %v1444, %v1443
    %v1454 = vpack.c.b16 %v1446, %v1445
    %1463 = vmatprep.subr.bf16.mxu0 0
    %1464 = vmatpush1.bf16.msra.mxu0 %v1447
    %1465 = vmatprep.subr.bf16.mxu0 0
    %1466 = vmatpush1.bf16.msra.mxu0 %v1448
    %1467 = vmatprep.subr.bf16.mxu0 0
    %1468 = vmatpush1.bf16.msra.mxu0 %v1449
    %1469 = vmatprep.subr.bf16.mxu0 0
    %1470 = vmatpush1.bf16.msra.mxu0 %v1450
    %1471 = vmatprep.subr.bf16.mxu0 0
    %1472 = vmatpush1.bf16.msra.mxu0 %v1451
    %1473 = vmatprep.subr.bf16.mxu0 0
    %1474 = vmatpush1.bf16.msra.mxu0 %v1452
    %1475 = vmatprep.subr.bf16.mxu0 0
    %1476 = vmatpush1.bf16.msra.mxu0 %v1453
    %1477 = vmatprep.subr.bf16.mxu0 0
    %1478 = vmatpush1.bf16.msra.mxu0 %v1454
    %1479 = vmatprep.subr.bf16.mxu0 0
    %1480 = vmatpush1.bf16.msra.mxu0 0
    %1481 = vmatprep.subr.bf16.mxu0 0
    %1482 = vmatpush1.bf16.msra.mxu0 0
    %1483 = vmatprep.subr.bf16.mxu0 0
    %1484 = vmatpush1.bf16.msra.mxu0 0
    %1485 = vmatprep.subr.bf16.mxu0 0
    %1486 = vmatpush1.bf16.msra.mxu0 0
    %1487 = vmatprep.subr.bf16.mxu0 0
    %1488 = vmatpush1.bf16.msra.mxu0 0
    %1489 = vmatprep.subr.bf16.mxu0 0
    %1490 = vmatpush1.bf16.msra.mxu0 0
    %1491 = vmatprep.subr.bf16.mxu0 0
    %1492 = vmatpush1.bf16.msra.mxu0 0
    %1493 = vmatprep.subr.bf16.mxu0 0
    %1494 = vmatpush1.bf16.msra.mxu0 0
    %1495 = vmatprep.mubr.bf16.mxu0 0
    %1496 = vmatmul.mubr.bf16.gmra.mrb[0].mxu0 %v1414
    %v1497 = vpop.f32.mrb[0].mxu0
    %v1498 = vadd.f32 0.0, %v1497
    %v1499 = vpop.f32.mrb[0].mxu0
    %v1500 = vpop.f32.mrb[0].mxu0
    %v1501 = vadd.f32 0.0, %v1500
    %v1502 = vpop.f32.mrb[0].mxu0
    %1503 = vdwg.mxu0
    %v1504 = vld [vmem:[%s18] sm:$0x1]
    %v1505 = vld [vmem:[%s19] sm:$0x1]
    %v1506 = vadd.f32 %v1498, %v1501
    %v1507 = vrot.slane %v1506, 4
    %v1508 = vadd.f32 %v1506, %v1507
    %v1509 = vrot.slane %v1508, 2
    %v1510 = vadd.f32 %v1508, %v1509
    %v1511 = vrot.slane %v1510, 1
    %v1512 = vadd.f32 %v1510, %v1511
    %v1513 = vmul.f32 %v1498, %v1498
    %v1514 = vmul.f32 %v1501, %v1501
    %v1515 = vadd.f32 %v1513, %v1514
    %v1516 = vrot.slane %v1515, 4
    %v1517 = vadd.f32 %v1515, %v1516
    %v1518 = vrot.slane %v1517, 2
    %v1519 = vadd.f32 %v1517, %v1518
    %v1520 = vrot.slane %v1519, 1
    %v1521 = vadd.f32 %v1519, %v1520
    %v1522 = vmul.f32 %v1512, 0.0625
    %v1523 = vmul.f32 %v1521, 0.0625
    %v1524 = vmul.f32 %v1522, %v1522
    %v1525 = vsub.f32 %v1523, %v1524
    %v1526 = vmax.f32 %v1525, 0.0
    %v1527 = vsub.f32 %v1498, %v1522
    %v1528 = vsub.f32 %v1501, %v1522
    %v1529 = vadd.f32 %v1526, 1e-05
    %v1530 = vrsqrt.pop %v1529
    %v1531 = vmul.f32 %v1527, %v1530
    %v1532 = vmul.f32 %v1528, %v1530
    %v1534 = vlaneseq
    %v1535 = vshrl.u32 %v1534, 7
    %v1536 = vsub.s32 0, %v1535
    %v1537 = vrot.slane %v1504, %v1536
    %v1539 = vmul.f32 %v1531, %v1537
    %v1540 = vmul.f32 %v1532, %v1537
    %v1542 = vlaneseq
    %v1543 = vshrl.u32 %v1542, 7
    %v1544 = vsub.s32 0, %v1543
    %v1545 = vrot.slane %v1505, %v1544
    %v1547 = vadd.f32 %v1539, %v1545
    %v1548 = vadd.f32 %v1540, %v1545
    %v1549 = vmax.f32 %v1547, 0.0
    %v1550 = vmax.f32 %v1548, 0.0
    %1551 = vst [vmem:[#allocation17] sm:$0xff] %v1549
    %1552 = vst [vmem:[#allocation17 + $0x8] sm:$0xff] %v1550
    // Predicated region
    $region118: #{tpu_custom_call.1} parent=1 // pred_check
      _
    $region119: #{tpu_custom_call.1} parent=1 // pred_check_branch
      %1554 = sbr.rel (0) target = $region121
    $region120: #{tpu_custom_call.1} parent=1 // pred_region
      %s1556 = ssub.s32 256, 256
      %1557 = vsyncadd [#allocation4], %s1556
      %s1558 = sshll.u32 [#allocation17], 4
      %s1559 = int_to_ptr.vmem [resolvable:$true] %s1558
      %1564 = dma.vmem_to_hbm [thread:$0]  %s1559, 256, %s20, [#allocation4], 128, 128, 8
    $region121: #{tpu_custom_call.1} parent=1 // pred_fallthru
      _
    // Predicated region
    $region122: #{tpu_custom_call.1} parent=1 // pred_check
      _
    $region123: #{tpu_custom_call.1} parent=1 // pred_check_branch
      %1566 = sbr.rel (0) target = $region125
    $region124: #{tpu_custom_call.1} parent=1 // pred_region
      %s1568 = ssub.s32 768, 768
      %1569 = vsyncadd [#allocation19], %s1568
      %s1570 = sshll.u32 [#allocation18], 4
      %s1571 = int_to_ptr.vmem [resolvable:$true] %s1570
      %1576 = dma.vmem_to_hbm [thread:$0]  %s1571, 768, %s21, [#allocation19], 128, 128, 8
    $region125: #{tpu_custom_call.1} parent=1 // pred_fallthru
      _
    // Predicated region
    $region126: #{tpu_custom_call.1} parent=1 // pred_check
      _
    $region127: #{tpu_custom_call.1} parent=1 // pred_check_branch
      %1578 = sbr.rel (0) target = $region129
    $region128: #{tpu_custom_call.1} parent=1 // pred_region
      %1579 = dma.done [#allocation4], 256
    $region129: #{tpu_custom_call.1} parent=1 // pred_fallthru
      _
    // Predicated region
    $region130: #{tpu_custom_call.1} parent=1 // pred_check
      _
    $region131: #{tpu_custom_call.1} parent=1 // pred_check_branch
      %1581 = sbr.rel (0) target = $region133
    $region132: #{tpu_custom_call.1} parent=1 // pred_region
      %1582 = dma.done [#allocation19], 768
    $region133: #{tpu_custom_call.1} parent=1 // pred_fallthru
      _
    %1583 = vsyncpa [#allocation3], 1
    %1584 = vsyncpa [#allocation6], 1
    %1585 = vsyncpa [#allocation9], 1
    %1586 = vsyncpa [#allocation12], 1
    %1587 = vsyncpa [#allocation15], 1
    %1588 = vsyncpa [#allocation4], 1
    %1589 = vsyncpa [#allocation19], 1

</llo_original>
